<compile_context>
chip_gen: v5e
topology: v5e:2x2
jax: 0.10.0
libtpu: 0.0.40
codegen_flags: <defaults>
</compile_context>

<pallas_src>
import math

import jax
import jax.numpy as jnp
import numpy as np
from jax.experimental import pallas as pl
from jax.experimental.pallas import tpu as pltpu


# ---------------------------------------------------------------------------
# In-kernel helpers (traced inside the Pallas kernel body).
# ---------------------------------------------------------------------------
def _pad_hw1(x):
    """Zero-pad a (H, W, C) array by 1 on both spatial dims -> (H+2, W+2, C)."""
    H, W, C = x.shape
    zr = jnp.zeros((1, W, C), x.dtype)
    x = jnp.concatenate([zr, x, zr], axis=0)          # (H+2, W, C)
    zc = jnp.zeros((H + 2, 1, C), x.dtype)
    return jnp.concatenate([zc, x, zc], axis=1)       # (H+2, W+2, C)


def _im2col_3x3(xp, H, W):
    """3x3 im2col of a padded (H+2, W+2, C) array -> (H*W, 9*C).

    Column order is (kh, kw, c), matching the packed weights below.
    """
    C = xp.shape[-1]
    cols = [xp[kh:kh + H, kw:kw + W, :] for kh in range(3) for kw in range(3)]
    patches = jnp.concatenate(cols, axis=-1)          # (H, W, 9*C)
    return patches.reshape(H * W, 9 * C)


def _fused_deconv_kernel(x_ref, w1_ref, b1_ref, w2_ref, b2_ref, o_ref):
    """Fused convTrans1 -> convTrans2 for ONE batch element.

    x_ref : (H, W, C0)         f32   low-res input (16, 16, 4)
    w1_ref: (9*C0, 4*C1)       bf16  layer-1 phase-packed GEMM weight (36, 128)
    b1_ref: (1, 4*C1)          f32
    w2_ref: (9*4*C1, 16*C2)    bf16  layer-2 effective weight on the 16-grid
    b2_ref: (1, 16*C2)         f32
    o_ref : (H*W, 16*C2)       f32   packed output: row (i*W + j),
                                     col (dy*4+dx)*C2 + c -> pixel (4i+dy, 4j+dx)
    """
    H, W, _ = x_ref.shape

    # ---- layer 1: pad -> im2col -> GEMM (+bias) ----------------------------
    x = _pad_hw1(x_ref[...].astype(jnp.bfloat16))                 # (H+2, W+2, C0)
    p1 = _im2col_3x3(x, H, W)                                     # (H*W, 9*C0)
    y1 = jnp.dot(p1, w1_ref[...], preferred_element_type=jnp.float32)
    y1 = y1 + b1_ref[...]                                         # (H*W, 4*C1)

    # ---- layer 2, directly on the phase-packed 16x16 grid ------------------
    # No depth-to-space needed: the sub-pixel interleave of Y1 and the phase
    # structure of layer 2 are folded into w2_ref (built in prepare_params).
    y1 = _pad_hw1(y1.astype(jnp.bfloat16).reshape(H, W, -1))      # (H+2, W+2, 4*C1)
    p2 = _im2col_3x3(y1, H, W)                                    # (H*W, 36*C1)
    y2 = jnp.dot(p2, w2_ref[...], preferred_element_type=jnp.float32)
    o_ref[...] = (y2 + b2_ref[...]).astype(o_ref.dtype)           # (H*W, 16*C2)


# ---------------------------------------------------------------------------
# Host-side weight packing (done once, outside the hot path).
# ---------------------------------------------------------------------------
def _phase_taps(w_t):
    """ConvTranspose2d weight (Cin, Cout, 6, 6) -> taps T[p, q, m, n, cin, cout].

    Output pixel (2i+p, 2j+q) of the stride-2/pad-2 deconv equals a 3x3 "same"
    conv of the pad-1 low-res input; tap (m, n) multiplies input (i+m-1, j+n-1)
    and equals w_t[:, :, p + 4 - 2m, q + 4 - 2n].
    """
    rows = []
    for p in range(2):
        cols = []
        for q in range(2):
            sk = w_t[:, :, p::2, q::2][:, :, ::-1, ::-1]      # (Cin, Cout, 3, 3)
            cols.append(jnp.transpose(sk, (2, 3, 0, 1)))      # (3, 3, Cin, Cout)
        rows.append(jnp.stack(cols))
    return jnp.stack(rows)                                    # (2, 2, 3, 3, Cin, Cout)


def prepare_params(params):
    """Pack both ConvTranspose2d weights for the fused Pallas kernel."""
    (w1, b1), (w2, b2) = params
    C0, C1 = w1.shape[0], w1.shape[1]
    C1_, C2 = w2.shape[0], w2.shape[1]
    assert C1 == C1_ and w1.shape[2:] == (6, 6) and w2.shape[2:] == (6, 6)

    # Layer 1: phase-packed weight (9*C0, 4*C1); column = (2p+q)*C1 + c1.
    t1 = _phase_taps(w1)                                      # (2,2,3,3,C0,C1)
    w1mat = jnp.concatenate(
        [t1[p, q].reshape(9 * C0, C1) for p in range(2) for q in range(2)],
        axis=1).astype(jnp.bfloat16)                          # (9*C0, 4*C1)
    b1v = jnp.tile(b1.astype(jnp.float32), 4).reshape(1, 4 * C1)

    # Layer 2: fold the depth-to-space of Y1 into an effective 3x3 conv on the
    # 16x16 grid.  Tap (m', p) of the 16-grid conv corresponds to tap
    # m = 2*m' + p - a - 1 of the 32-grid phase conv (valid iff 0 <= m < 3),
    # where a is the height parity of the layer-2 "pixel"; same for width.
    t2 = _phase_taps(w2)                                      # (2,2,3,3,C1,C2)
    mp = np.arange(3)[:, None, None, None]                    # m'
    pp = np.arange(2)[None, :, None, None]                    # p (Y1 parity)
    aa = np.arange(2)[None, None, :, None]                    # a (sub-pixel)
    mm = np.arange(3)[None, None, None, :]                    # m (layer-2 tap)
    sel = jnp.asarray((mm == 2 * mp + pp - aa - 1).astype(np.float32))  # (3,2,2,3)

    # rows: (m', n', p, q, c)   cols: (a, p2, b, q2, o) == (dy*4+dx)*C2 + o
    w2eff = jnp.einsum('Mpam,Nqbn,PQmnco->MNpqcaPbQo', sel, sel, t2)
    w2eff = w2eff.reshape(9 * 4 * C1, 16 * C2).astype(jnp.bfloat16)
    b2v = jnp.tile(b2.astype(jnp.float32), 16).reshape(1, 16 * C2)
    return w1mat, b1v, w2eff, b2v


# ---------------------------------------------------------------------------
# Forward pass.
# ---------------------------------------------------------------------------
@jax.jit
def naive_trans_conv_forward(packed, x_nchw):
    """NaiveTransConv.forward (convTrans1 -> convTrans2), NCHW in / NCHW out."""
    w1mat, b1v, w2eff, b2v = packed
    N, C0, H, W = x_nchw.shape
    C2 = b2v.shape[1] // 16

    x = jnp.transpose(x_nchw, (0, 2, 3, 1))                   # (N, H, W, C0)

    out_packed = pl.pallas_call(
        _fused_deconv_kernel,
        out_shape=jax.ShapeDtypeStruct((N, H * W, 16 * C2), jnp.float32),
        grid=(N,),
        in_specs=[
            pl.BlockSpec((None, H, W, C0), lambda n: (n, 0, 0, 0)),
            pl.BlockSpec(w1mat.shape, lambda n: (0, 0)),
            pl.BlockSpec(b1v.shape, lambda n: (0, 0)),
            pl.BlockSpec(w2eff.shape, lambda n: (0, 0)),
            pl.BlockSpec(b2v.shape, lambda n: (0, 0)),
        ],
        out_specs=pl.BlockSpec((None, H * W, 16 * C2), lambda n: (n, 0, 0)),
        compiler_params=pltpu.CompilerParams(
            dimension_semantics=("parallel",)),
    )(x, w1mat, b1v, w2eff, b2v)

    # Unpack sub-pixel offsets: row (i*W+j), col (dy*4+dx)*C2 + c maps to
    # output pixel (4i+dy, 4j+dx, c).  Emit NCHW.
    y = out_packed.reshape(N, H, W, 4, 4, C2)
    y = jnp.transpose(y, (0, 5, 1, 3, 2, 4))                  # (N, C2, H, 4, W, 4)
    return y.reshape(N, C2, 4 * H, 4 * W)


# ---------------------------------------------------------------------------
# Parameter init and a pure-JAX reference (matches PyTorch ConvTranspose2d).
# ---------------------------------------------------------------------------
def init_params(key, num_in, deep, k=6):
    k1, k2, k3, k4 = jax.random.split(key, 4)
    w1 = jax.random.normal(k1, (num_in, deep, k, k), jnp.float32)
    w1 = w1 / math.sqrt(num_in * k * k)
    b1 = 0.1 * jax.random.normal(k2, (deep,), jnp.float32)
    w2 = jax.random.normal(k3, (deep, num_in, k, k), jnp.float32)
    w2 = w2 / math.sqrt(deep * k * k)
    b2 = 0.1 * jax.random.normal(k4, (num_in,), jnp.float32)
    return [(w1, b1), (w2, b2)]


def naive_trans_conv_reference(params, x_nchw):
    """Pure-JAX (XLA conv) f32 reference for ConvTranspose2d(k=6, s=2, p=2)."""
    x = jnp.transpose(x_nchw, (0, 2, 3, 1))
    for (w_t, b) in params:
        K = w_t.shape[2]
        w_conv = jnp.transpose(w_t, (2, 3, 0, 1))[::-1, ::-1, :, :]
        lo = K - 1 - 2                                        # padding = 2
        x = jax.lax.conv_general_dilated(
            x, w_conv, window_strides=(1, 1),
            padding=[(lo, lo), (lo, lo)],
            lhs_dilation=(2, 2),
            dimension_numbers=("NHWC", "HWIO", "NHWC")) + b
    return jnp.transpose(x, (0, 3, 1, 2))


if __name__ == "__main__":
    num_in, deep = 4, 32
    key = jax.random.PRNGKey(0)
    kx, kp = jax.random.split(key)

    x = jax.random.normal(kx, (2, num_in, 16, 16), jnp.float32)
    params = init_params(kp, num_in, deep)
    packed = prepare_params(params)

    out = jax.block_until_ready(naive_trans_conv_forward(packed, x))
    ref = jax.block_until_ready(naive_trans_conv_reference(params, x))

    assert out.shape == (2, num_in, 64, 64), out.shape
    max_err = float(jnp.max(jnp.abs(out - ref)))
    scale = float(jnp.max(jnp.abs(ref))) + 1e-6
    assert max_err <= 2e-2 * scale, (max_err, scale)

    print("KERNEL_OK")
</pallas_src>

<mosaic_0001>
module attributes {stable_mosaic.version = 11 : i64} {
  func.func @_fused_deconv_kernel(%arg0: i32, %arg1: memref<1x16x16x4xf32, #tpu.memory_space<vmem>>, %arg2: memref<36x128xbf16, #tpu.memory_space<vmem>>, %arg3: memref<1x128xf32, #tpu.memory_space<vmem>>, %arg4: memref<1152x64xbf16, #tpu.memory_space<vmem>>, %arg5: memref<1x64xf32, #tpu.memory_space<vmem>>, %arg6: memref<1x256x64xf32, #tpu.memory_space<vmem>>) attributes {dimension_semantics = [#tpu.dimension_semantics<parallel>], iteration_bounds = array<i64: 2>, scalar_prefetch = 0 : i64, scratch_operands = 0 : i64, tpu.core_type = #tpu.core_type<tc>, window_params = [{transform_indices = @transform_0, window_bounds = array<i64: 1, 16, 16, 4>}, {pipeline_mode = #tpu.pipeline_mode<synchronous>, transform_indices = @transform_1, window_bounds = array<i64: 36, 128>}, {pipeline_mode = #tpu.pipeline_mode<synchronous>, transform_indices = @transform_2, window_bounds = array<i64: 1, 128>}, {pipeline_mode = #tpu.pipeline_mode<synchronous>, transform_indices = @transform_3, window_bounds = array<i64: 1152, 64>}, {pipeline_mode = #tpu.pipeline_mode<synchronous>, transform_indices = @transform_4, window_bounds = array<i64: 1, 64>}, {transform_indices = @transform_5, window_bounds = array<i64: 1, 256, 64>}]} {
    %c0 = arith.constant 0 : index
    %c0_0 = arith.constant 0 : index
    %c0_1 = arith.constant 0 : index
    %c0_2 = arith.constant 0 : index
    %0 = vector.load %arg1[%c0, %c0_0, %c0_1, %c0_2] : memref<1x16x16x4xf32, #tpu.memory_space<vmem>>, vector<1x16x16x4xf32>
    %1 = vector.shape_cast %0 : vector<1x16x16x4xf32> to vector<16x16x4xf32>
    %2 = arith.truncf %1 : vector<16x16x4xf32> to vector<16x16x4xbf16>
    %cst = arith.constant 0.000000e+00 : bf16
    %3 = vector.broadcast %cst : bf16 to vector<1x16x4xbf16>
    %4 = tpu.concatenate %3, %2, %3 in 0 : vector<1x16x4xbf16>, vector<16x16x4xbf16>, vector<1x16x4xbf16> -> vector<18x16x4xbf16>
    %cst_3 = arith.constant 0.000000e+00 : bf16
    %5 = vector.broadcast %cst_3 : bf16 to vector<18x1x4xbf16>
    %6 = tpu.concatenate %5, %4, %5 in 1 : vector<18x1x4xbf16>, vector<18x16x4xbf16>, vector<18x1x4xbf16> -> vector<18x18x4xbf16>
    %7 = vector.extract_strided_slice %6 {offsets = [0, 0, 0], sizes = [16, 16, 4], strides = [1, 1, 1]} : vector<18x18x4xbf16> to vector<16x16x4xbf16>
    %8 = vector.extract_strided_slice %6 {offsets = [0, 1, 0], sizes = [16, 16, 4], strides = [1, 1, 1]} : vector<18x18x4xbf16> to vector<16x16x4xbf16>
    %9 = vector.extract_strided_slice %6 {offsets = [0, 2, 0], sizes = [16, 16, 4], strides = [1, 1, 1]} : vector<18x18x4xbf16> to vector<16x16x4xbf16>
    %10 = vector.extract_strided_slice %6 {offsets = [1, 0, 0], sizes = [16, 16, 4], strides = [1, 1, 1]} : vector<18x18x4xbf16> to vector<16x16x4xbf16>
    %11 = vector.extract_strided_slice %6 {offsets = [1, 1, 0], sizes = [16, 16, 4], strides = [1, 1, 1]} : vector<18x18x4xbf16> to vector<16x16x4xbf16>
    %12 = vector.extract_strided_slice %6 {offsets = [1, 2, 0], sizes = [16, 16, 4], strides = [1, 1, 1]} : vector<18x18x4xbf16> to vector<16x16x4xbf16>
    %13 = vector.extract_strided_slice %6 {offsets = [2, 0, 0], sizes = [16, 16, 4], strides = [1, 1, 1]} : vector<18x18x4xbf16> to vector<16x16x4xbf16>
    %14 = vector.extract_strided_slice %6 {offsets = [2, 1, 0], sizes = [16, 16, 4], strides = [1, 1, 1]} : vector<18x18x4xbf16> to vector<16x16x4xbf16>
    %15 = vector.extract_strided_slice %6 {offsets = [2, 2, 0], sizes = [16, 16, 4], strides = [1, 1, 1]} : vector<18x18x4xbf16> to vector<16x16x4xbf16>
    %16 = tpu.concatenate %7, %8, %9, %10, %11, %12, %13, %14, %15 in 2 : vector<16x16x4xbf16>, vector<16x16x4xbf16>, vector<16x16x4xbf16>, vector<16x16x4xbf16>, vector<16x16x4xbf16>, vector<16x16x4xbf16>, vector<16x16x4xbf16>, vector<16x16x4xbf16>, vector<16x16x4xbf16> -> vector<16x16x36xbf16>
    %17 = vector.shape_cast %16 : vector<16x16x36xbf16> to vector<256x36xbf16>
    %c0_4 = arith.constant 0 : index
    %c0_5 = arith.constant 0 : index
    %18 = vector.load %arg2[%c0_4, %c0_5] : memref<36x128xbf16, #tpu.memory_space<vmem>>, vector<36x128xbf16>
    %cst_6 = arith.constant dense<0.000000e+00> : vector<256x128xf32>
    %19 = tpu.matmul %17, %18, %cst_6 {dimension_numbers = #tpu.dot_dimension_numbers<[1], [0], [0], [1], [0, 0, 1, 1], [], []>} : vector<256x36xbf16>, vector<36x128xbf16>, vector<256x128xf32> -> vector<256x128xf32>
    %c0_7 = arith.constant 0 : index
    %c0_8 = arith.constant 0 : index
    %20 = vector.load %arg3[%c0_7, %c0_8] : memref<1x128xf32, #tpu.memory_space<vmem>>, vector<1x128xf32>
    %21 = vector.broadcast %20 : vector<1x128xf32> to vector<256x128xf32>
    %22 = arith.addf %19, %21 : vector<256x128xf32>
    %23 = arith.truncf %22 : vector<256x128xf32> to vector<256x128xbf16>
    %24 = vector.shape_cast %23 : vector<256x128xbf16> to vector<16x16x128xbf16>
    %cst_9 = arith.constant 0.000000e+00 : bf16
    %25 = vector.broadcast %cst_9 : bf16 to vector<1x16x128xbf16>
    %26 = tpu.concatenate %25, %24, %25 in 0 : vector<1x16x128xbf16>, vector<16x16x128xbf16>, vector<1x16x128xbf16> -> vector<18x16x128xbf16>
    %cst_10 = arith.constant 0.000000e+00 : bf16
    %27 = vector.broadcast %cst_10 : bf16 to vector<18x1x128xbf16>
    %28 = tpu.concatenate %27, %26, %27 in 1 : vector<18x1x128xbf16>, vector<18x16x128xbf16>, vector<18x1x128xbf16> -> vector<18x18x128xbf16>
    %29 = vector.extract_strided_slice %28 {offsets = [0, 0, 0], sizes = [16, 16, 128], strides = [1, 1, 1]} : vector<18x18x128xbf16> to vector<16x16x128xbf16>
    %30 = vector.extract_strided_slice %28 {offsets = [0, 1, 0], sizes = [16, 16, 128], strides = [1, 1, 1]} : vector<18x18x128xbf16> to vector<16x16x128xbf16>
    %31 = vector.extract_strided_slice %28 {offsets = [0, 2, 0], sizes = [16, 16, 128], strides = [1, 1, 1]} : vector<18x18x128xbf16> to vector<16x16x128xbf16>
    %32 = vector.extract_strided_slice %28 {offsets = [1, 0, 0], sizes = [16, 16, 128], strides = [1, 1, 1]} : vector<18x18x128xbf16> to vector<16x16x128xbf16>
    %33 = vector.extract_strided_slice %28 {offsets = [1, 1, 0], sizes = [16, 16, 128], strides = [1, 1, 1]} : vector<18x18x128xbf16> to vector<16x16x128xbf16>
    %34 = vector.extract_strided_slice %28 {offsets = [1, 2, 0], sizes = [16, 16, 128], strides = [1, 1, 1]} : vector<18x18x128xbf16> to vector<16x16x128xbf16>
    %35 = vector.extract_strided_slice %28 {offsets = [2, 0, 0], sizes = [16, 16, 128], strides = [1, 1, 1]} : vector<18x18x128xbf16> to vector<16x16x128xbf16>
    %36 = vector.extract_strided_slice %28 {offsets = [2, 1, 0], sizes = [16, 16, 128], strides = [1, 1, 1]} : vector<18x18x128xbf16> to vector<16x16x128xbf16>
    %37 = vector.extract_strided_slice %28 {offsets = [2, 2, 0], sizes = [16, 16, 128], strides = [1, 1, 1]} : vector<18x18x128xbf16> to vector<16x16x128xbf16>
    %38 = tpu.concatenate %29, %30, %31, %32, %33, %34, %35, %36, %37 in 2 : vector<16x16x128xbf16>, vector<16x16x128xbf16>, vector<16x16x128xbf16>, vector<16x16x128xbf16>, vector<16x16x128xbf16>, vector<16x16x128xbf16>, vector<16x16x128xbf16>, vector<16x16x128xbf16>, vector<16x16x128xbf16> -> vector<16x16x1152xbf16>
    %39 = vector.shape_cast %38 : vector<16x16x1152xbf16> to vector<256x1152xbf16>
    %c0_11 = arith.constant 0 : index
    %c0_12 = arith.constant 0 : index
    %40 = vector.load %arg4[%c0_11, %c0_12] : memref<1152x64xbf16, #tpu.memory_space<vmem>>, vector<1152x64xbf16>
    %cst_13 = arith.constant dense<0.000000e+00> : vector<256x64xf32>
    %41 = tpu.matmul %39, %40, %cst_13 {dimension_numbers = #tpu.dot_dimension_numbers<[1], [0], [0], [1], [0, 0, 1, 1], [], []>} : vector<256x1152xbf16>, vector<1152x64xbf16>, vector<256x64xf32> -> vector<256x64xf32>
    %c0_14 = arith.constant 0 : index
    %c0_15 = arith.constant 0 : index
    %42 = vector.load %arg5[%c0_14, %c0_15] : memref<1x64xf32, #tpu.memory_space<vmem>>, vector<1x64xf32>
    %43 = vector.broadcast %42 : vector<1x64xf32> to vector<256x64xf32>
    %44 = arith.addf %41, %43 : vector<256x64xf32>
    %c0_16 = arith.constant 0 : index
    %c0_17 = arith.constant 0 : index
    %c0_18 = arith.constant 0 : index
    %45 = vector.load %arg6[%c0_16, %c0_17, %c0_18] : memref<1x256x64xf32, #tpu.memory_space<vmem>>, vector<1x256x64xf32>
    %46 = vector.shape_cast %45 : vector<1x256x64xf32> to vector<256x64xf32>
    %47 = vector.shape_cast %44 : vector<256x64xf32> to vector<1x256x64xf32>
    tpu.vector_store %arg6[%c0_16, %c0_17, %c0_18], %47 {strides = array<i32>} : memref<1x256x64xf32, #tpu.memory_space<vmem>>, vector<1x256x64xf32>,
    return
  }
  func.func @transform_0(%arg0: i32) -> (i32, i32, i32, i32) {
    %c0_i32 = arith.constant 0 : i32
    %c0_i32_0 = arith.constant 0 : i32
    %c0_i32_1 = arith.constant 0 : i32
    %c0_i32_2 = arith.constant 0 : i32
    return %arg0, %c0_i32, %c0_i32_0, %c0_i32_1 : i32, i32, i32, i32
  }
  func.func @transform_1(%arg0: i32) -> (i32, i32) {
    %c0_i32 = arith.constant 0 : i32
    %c0_i32_0 = arith.constant 0 : i32
    %c0_i32_1 = arith.constant 0 : i32
    return %c0_i32, %c0_i32_0 : i32, i32
  }
  func.func @transform_2(%arg0: i32) -> (i32, i32) {
    %c0_i32 = arith.constant 0 : i32
    %c0_i32_0 = arith.constant 0 : i32
    %c0_i32_1 = arith.constant 0 : i32
    return %c0_i32, %c0_i32_0 : i32, i32
  }
  func.func @transform_3(%arg0: i32) -> (i32, i32) {
    %c0_i32 = arith.constant 0 : i32
    %c0_i32_0 = arith.constant 0 : i32
    %c0_i32_1 = arith.constant 0 : i32
    return %c0_i32, %c0_i32_0 : i32, i32
  }
  func.func @transform_4(%arg0: i32) -> (i32, i32) {
    %c0_i32 = arith.constant 0 : i32
    %c0_i32_0 = arith.constant 0 : i32
    %c0_i32_1 = arith.constant 0 : i32
    return %c0_i32, %c0_i32_0 : i32, i32
  }
  func.func @transform_5(%arg0: i32) -> (i32, i32, i32) {
    %c0_i32 = arith.constant 0 : i32
    %c0_i32_0 = arith.constant 0 : i32
    %c0_i32_1 = arith.constant 0 : i32
    return %arg0, %c0_i32, %c0_i32_0 : i32, i32, i32
  }
}

</mosaic_0001>

<llo_original>
// kernel: naive_trans_conv_forward.1
$region0: #{naive_trans_conv_forward.1}
  #allocation0 [shape = 'u32[]', space=smem, size = 0x4, offset = 0x4, fixed_abs, tag = 'smem constant byte address 0x4 - core index']
  #allocation1 [shape = 'u32[72,128]{1,0:T(1,128)}', space=vmem, size = 0x9000, scoped, tag = 'internal scratch']
  %s0 = inlined_call_operand.vmem [shape: f32[2,16,16,4], index: 0, kind: input, shape index: {}]
  %s1 = inlined_call_operand.hbm [shape: bf16[36,128], index: 1, kind: input, shape index: {}]
  %s2 = inlined_call_operand.hbm [shape: f32[1,128], index: 2, kind: input, shape index: {}]
  %s3 = inlined_call_operand.vmem [shape: bf16[1152,64], index: 3, kind: input, shape index: {}]
  %s4 = inlined_call_operand.hbm [shape: f32[1,64], index: 4, kind: input, shape index: {}]
  %s5 = inlined_call_operand.vmem [shape: f32[2,256,64], index: 5, kind: output, shape index: {}]
  %s6 = sld [smem:[#allocation0]]
  $region65: #{naive_trans_conv_forward.1} parent=0
    _
  %s8 = ssub.s32 1, %s6
  %s9 = scalar_select 0, %s8, %s6
  $region1: #{naive_trans_conv_forward.1} parent=0
    #allocation2 [shape = 'u8[10240]{0}', space=vmem, size = 0x2800, scoped, tag = 'input window, operand 1, single buffered']
    #allocation3 [shape = 's32[2]{0}', space=sflag, size = 0x8, scoped, tag = 'scoped memory for naive_trans_conv_forward.1']
    #allocation4 [shape = 'u8[512]{0}', space=vmem, size = 0x400, scoped, tag = 'input window, operand 2, single buffered']
    #allocation5 [shape = 's32[1]{0}', space=sflag, size = 0x4, scoped, tag = 'scoped memory for naive_trans_conv_forward.1']
    #allocation6 [shape = 'u8[512]{0}', space=vmem, size = 0x400, scoped, tag = 'input window, operand 4, single buffered']
    %10 = vsyncpa [#allocation3], 0
    %11 = vsyncpa [#allocation5], 0
    loop: start=0, step=1, limit=4
    $region2: #{naive_trans_conv_forward.1} parent=1 // loop_pre_header
      _
    $region3: #{naive_trans_conv_forward.1} parent=1 // loop_header
      %s13 = sphi 0, %s17
      %p14 = scmp.ge.s32.totalorder %s13, 4
      %s23 = sphi 0, %s25
      %s26 = sphi 0, %s23
      %s27 = sphi 0, %s26
      %s43 = sphi 0, %s27
      %s47 = sphi 0, %s47
      %s49 = sphi 0, %s47
      %s50 = sphi 0, %s49
      %s64 = sphi 0, %s50
      %s68 = sphi 0, %s68
      %s70 = sphi 0, %s68
      %s71 = sphi 0, %s70
      %s85 = sphi 0, %s71
      %s89 = sphi 0, %s89
      %s91 = sphi 0, %s89
      %s92 = sphi 0, %s91
      %s106 = sphi 0, %s92
      %s110 = sphi 0, %s110
      %s112 = sphi 0, %s110
      %s113 = sphi 0, %s112
      %s127 = sphi 0, %s113
      %s133 = sphi 0, %s135
      %s136 = sphi 0, %s133
      %s137 = sphi 0, %s136
      %s153 = sphi 0, %s137
    $region4: #{naive_trans_conv_forward.1} parent=1 // loop_header_branch
      %16 = sbr.rel (%p14) target = $region8
    $region5: #{naive_trans_conv_forward.1} parent=1 // loop_body
      %s18 = ssub.s32 %s13, 1
      %s19 = ssub.s32 %s13, 2
      %s20 = sadd.s32 %s13, 1
      %s21 = ssub.s32 %s13, %s20
      %p22 = scmp.eq.s32.totalorder %s21, 0
      %s24 = sadd.s32 %s23, 1
      %s25 = scalar_select %p22, %s23, %s24
      %p28 = pneg %p22
      %p29 = scmp.eq.s32.totalorder %s13, 1
      %p30 = por %p28, %p29
      %p31 = scmp.ne.s32.totalorder %s23, %s26
      %p32 = scmp.eq.s32.totalorder %s13, 0
      %p33 = por %p31, %p32
      %p34 = scmp.ne.s32.totalorder %s23, %s26
      %p35 = scmp.eq.s32.totalorder %s18, 1
      %p36 = por %p34, %p35
      %p37 = scmp.ne.s32.totalorder %s26, %s27
      %p38 = scmp.eq.s32.totalorder %s18, 0
      %p39 = por %p37, %p38
      %p40 = scmp.ne.s32.totalorder %s26, %s27
      %p41 = scmp.eq.s32.totalorder %s19, 1
      %p42 = por %p40, %p41
      %p44 = scmp.ne.s32.totalorder %s27, %s43
      %p45 = scmp.eq.s32.totalorder %s19, 0
      %p46 = por %p44, %p45
      %s48 = sadd.s32 %s47, 1
      %p51 = scmp.eq.s32.totalorder %s13, 1
      %p52 = scmp.ne.s32.totalorder %s47, %s49
      %p53 = scmp.eq.s32.totalorder %s13, 0
      %p54 = por %p52, %p53
      %p55 = scmp.ne.s32.totalorder %s47, %s49
      %p56 = scmp.eq.s32.totalorder %s18, 1
      %p57 = por %p55, %p56
      %p58 = scmp.ne.s32.totalorder %s49, %s50
      %p59 = scmp.eq.s32.totalorder %s18, 0
      %p60 = por %p58, %p59
      %p61 = scmp.ne.s32.totalorder %s49, %s50
      %p62 = scmp.eq.s32.totalorder %s19, 1
      %p63 = por %p61, %p62
      %p65 = scmp.ne.s32.totalorder %s50, %s64
      %p66 = scmp.eq.s32.totalorder %s19, 0
      %p67 = por %p65, %p66
      %s69 = sadd.s32 %s68, 1
      %p72 = scmp.eq.s32.totalorder %s13, 1
      %p73 = scmp.ne.s32.totalorder %s68, %s70
      %p74 = scmp.eq.s32.totalorder %s13, 0
      %p75 = por %p73, %p74
      %p76 = scmp.ne.s32.totalorder %s68, %s70
      %p77 = scmp.eq.s32.totalorder %s18, 1
      %p78 = por %p76, %p77
      %p79 = scmp.ne.s32.totalorder %s70, %s71
      %p80 = scmp.eq.s32.totalorder %s18, 0
      %p81 = por %p79, %p80
      %p82 = scmp.ne.s32.totalorder %s70, %s71
      %p83 = scmp.eq.s32.totalorder %s19, 1
      %p84 = por %p82, %p83
      %p86 = scmp.ne.s32.totalorder %s71, %s85
      %p87 = scmp.eq.s32.totalorder %s19, 0
      %p88 = por %p86, %p87
      %s90 = sadd.s32 %s89, 1
      %p93 = scmp.eq.s32.totalorder %s13, 1
      %p94 = scmp.ne.s32.totalorder %s89, %s91
      %p95 = scmp.eq.s32.totalorder %s13, 0
      %p96 = por %p94, %p95
      %p97 = scmp.ne.s32.totalorder %s89, %s91
      %p98 = scmp.eq.s32.totalorder %s18, 1
      %p99 = por %p97, %p98
      %p100 = scmp.ne.s32.totalorder %s91, %s92
      %p101 = scmp.eq.s32.totalorder %s18, 0
      %p102 = por %p100, %p101
      %p103 = scmp.ne.s32.totalorder %s91, %s92
      %p104 = scmp.eq.s32.totalorder %s19, 1
      %p105 = por %p103, %p104
      %p107 = scmp.ne.s32.totalorder %s92, %s106
      %p108 = scmp.eq.s32.totalorder %s19, 0
      %p109 = por %p107, %p108
      %s111 = sadd.s32 %s110, 1
      %p114 = scmp.eq.s32.totalorder %s13, 1
      %p115 = scmp.ne.s32.totalorder %s110, %s112
      %p116 = scmp.eq.s32.totalorder %s13, 0
      %p117 = por %p115, %p116
      %p118 = scmp.ne.s32.totalorder %s110, %s112
      %p119 = scmp.eq.s32.totalorder %s18, 1
      %p120 = por %p118, %p119
      %p121 = scmp.ne.s32.totalorder %s112, %s113
      %p122 = scmp.eq.s32.totalorder %s18, 0
      %p123 = por %p121, %p122
      %p124 = scmp.ne.s32.totalorder %s112, %s113
      %p125 = scmp.eq.s32.totalorder %s19, 1
      %p126 = por %p124, %p125
      %p128 = scmp.ne.s32.totalorder %s113, %s127
      %p129 = scmp.eq.s32.totalorder %s19, 0
      %p130 = por %p128, %p129
      %s131 = ssub.s32 %s13, %s20
      %p132 = scmp.eq.s32.totalorder %s131, 0
      %s134 = sadd.s32 %s133, 1
      %s135 = scalar_select %p132, %s133, %s134
      %p138 = pneg %p132
      %p139 = scmp.eq.s32.totalorder %s13, 1
      %p140 = por %p138, %p139
      %p141 = scmp.ne.s32.totalorder %s133, %s136
      %p142 = scmp.eq.s32.totalorder %s13, 0
      %p143 = por %p141, %p142
      %p144 = scmp.ne.s32.totalorder %s133, %s136
      %p145 = scmp.eq.s32.totalorder %s18, 1
      %p146 = por %p144, %p145
      %p147 = scmp.ne.s32.totalorder %s136, %s137
      %p148 = scmp.eq.s32.totalorder %s18, 0
      %p149 = por %p147, %p148
      %p150 = scmp.ne.s32.totalorder %s136, %s137
      %p151 = scmp.eq.s32.totalorder %s19, 1
      %p152 = por %p150, %p151
      %p154 = scmp.ne.s32.totalorder %s137, %s153
      %p155 = scmp.eq.s32.totalorder %s19, 0
      %p156 = por %p154, %p155
      %p157 = scmp.le.s32.totalorder 1, %s13
      %p158 = scmp.lt.s32.totalorder %s13, 3
      %p159 = pnand %p157, %p158
      %p160 = pneg %p159
      // Predicated region
      $region9: #{naive_trans_conv_forward.1} parent=5 // pred_check
        _
      $region10: #{naive_trans_conv_forward.1} parent=5 // pred_check_branch
        %162 = sbr.rel (%p159) target = $region12
      $region11: #{naive_trans_conv_forward.1} parent=5 // pred_region
        %s163 = ssub.s32 %s13, 1
        // Predicated region
        $region13: #{naive_trans_conv_forward.1} parent=11 // pred_check
          %p164 = pneg %p60
        $region14: #{naive_trans_conv_forward.1} parent=11 // pred_check_branch
          %166 = sbr.rel (%p164) target = $region16
        $region15: #{naive_trans_conv_forward.1} parent=11 // pred_region
          %168 = vsyncadd [#allocation3], 0
          %s169 = sshll.u32 %s1, 4
          %s170 = int_to_ptr.hbm [resolvable:$true] %s169
          %s171 = sshll.u32 [#allocation2], 4
          %s172 = int_to_ptr.vmem [resolvable:$true] %s171
          %177 = dma.hbm_to_vmem [thread:$0]  %s170, 320, %s172, [#allocation3], 64, 64, 4
        $region16: #{naive_trans_conv_forward.1} parent=11 // pred_fallthru
          _
        // Predicated region
        $region17: #{naive_trans_conv_forward.1} parent=11 // pred_check
          %p178 = pneg %p81
        $region18: #{naive_trans_conv_forward.1} parent=11 // pred_check_branch
          %180 = sbr.rel (%p178) target = $region20
        $region19: #{naive_trans_conv_forward.1} parent=11 // pred_region
          %182 = vsyncadd [#allocation5], 0
          %s184 = sshll.u32 %s2, 4
          %s185 = int_to_ptr.hbm [resolvable:$true] %s184
          %s186 = sshll.u32 [#allocation4], 4
          %s187 = int_to_ptr.vmem [resolvable:$true] %s186
          %189 = dma.hbm_to_vmem [thread:$0]  %s185, 16, %s187, [#allocation5]
        $region20: #{naive_trans_conv_forward.1} parent=11 // pred_fallthru
          _
        // Predicated region
        $region21: #{naive_trans_conv_forward.1} parent=11 // pred_check
          %p190 = pneg %p102
        $region22: #{naive_trans_conv_forward.1} parent=11 // pred_check_branch
          %192 = sbr.rel (%p190) target = $region24
        $region23: #{naive_trans_conv_forward.1} parent=11 // pred_region
          _
        $region24: #{naive_trans_conv_forward.1} parent=11 // pred_fallthru
          _
        // Predicated region
        $region25: #{naive_trans_conv_forward.1} parent=11 // pred_check
          %p193 = pneg %p123
        $region26: #{naive_trans_conv_forward.1} parent=11 // pred_check_branch
          %195 = sbr.rel (%p193) target = $region28
        $region27: #{naive_trans_conv_forward.1} parent=11 // pred_region
          %197 = vsyncadd [#allocation5], 0
          %s199 = sshll.u32 %s4, 4
          %s200 = int_to_ptr.hbm [resolvable:$true] %s199
          %s201 = sshll.u32 [#allocation6], 4
          %s202 = int_to_ptr.vmem [resolvable:$true] %s201
          %204 = dma.hbm_to_vmem [thread:$0]  %s200, 16, %s202, [#allocation5]
        $region28: #{naive_trans_conv_forward.1} parent=11 // pred_fallthru
          _
      $region12: #{naive_trans_conv_forward.1} parent=5 // pred_fallthru
        _
      %p205 = scmp.lt.s32.totalorder %s13, 2
      // Predicated region
      $region29: #{naive_trans_conv_forward.1} parent=5 // pred_check
        %p206 = pneg %p205
      $region30: #{naive_trans_conv_forward.1} parent=5 // pred_check_branch
        %208 = sbr.rel (%p206) target = $region32
      $region31: #{naive_trans_conv_forward.1} parent=5 // pred_region
        // Predicated region
        $region33: #{naive_trans_conv_forward.1} parent=31 // pred_check
          %p209 = pneg %p33
        $region34: #{naive_trans_conv_forward.1} parent=31 // pred_check_branch
          %211 = sbr.rel (%p209) target = $region36
        $region35: #{naive_trans_conv_forward.1} parent=31 // pred_region
          %p212 = scmp.lt.s32.totalorder %s13, 1
          %s213 = scalar_select %p212, %s13, 1
          %s214 = smul.addr %s213, 32
          %s215 = smul.addr %s214, 8
          %s216 = scalar_lea.vmem %s0, %s215
        $region36: #{naive_trans_conv_forward.1} parent=31 // pred_fallthru
          _
      $region32: #{naive_trans_conv_forward.1} parent=5 // pred_fallthru
        _
      %p217 = scmp.le.s32.totalorder 1, %s13
      %p218 = scmp.lt.s32.totalorder %s13, 3
      %p219 = pnand %p217, %p218
      %p220 = pneg %p219
      // Predicated region
      $region37: #{naive_trans_conv_forward.1} parent=5 // pred_check
        _
      $region38: #{naive_trans_conv_forward.1} parent=5 // pred_check_branch
        %222 = sbr.rel (%p219) target = $region40
      $region39: #{naive_trans_conv_forward.1} parent=5 // pred_region
        %s223 = ssub.s32 %s13, 1
        // Predicated region
        $region41: #{naive_trans_conv_forward.1} parent=39 // pred_check
          %p224 = pneg %p60
        $region42: #{naive_trans_conv_forward.1} parent=39 // pred_check_branch
          %226 = sbr.rel (%p224) target = $region44
        $region43: #{naive_trans_conv_forward.1} parent=39 // pred_region
          %228 = dma.done [#allocation3], 320
        $region44: #{naive_trans_conv_forward.1} parent=39 // pred_fallthru
          _
        // Predicated region
        $region45: #{naive_trans_conv_forward.1} parent=39 // pred_check
          %p229 = pneg %p81
        $region46: #{naive_trans_conv_forward.1} parent=39 // pred_check_branch
          %231 = sbr.rel (%p229) target = $region48
        $region47: #{naive_trans_conv_forward.1} parent=39 // pred_region
          %233 = dma.done [#allocation5], 16
        $region48: #{naive_trans_conv_forward.1} parent=39 // pred_fallthru
          _
        // Predicated region
        $region49: #{naive_trans_conv_forward.1} parent=39 // pred_check
          %p234 = pneg %p123
        $region50: #{naive_trans_conv_forward.1} parent=39 // pred_check_branch
          %236 = sbr.rel (%p234) target = $region52
        $region51: #{naive_trans_conv_forward.1} parent=39 // pred_region
          %238 = dma.done [#allocation5], 16
        $region52: #{naive_trans_conv_forward.1} parent=39 // pred_fallthru
          _
        %p239 = scmp.lt.s32.totalorder %s18, 1
        %s240 = scalar_select %p239, %s18, 1
        %s241 = smul.addr %s240, 32
        %s242 = smul.addr %s241, 8
        %s243 = scalar_lea.vmem %s0, %s242
        %p244 = pneg %p39
        %p245 = pneg %p36
        %p246 = pneg %p60
        %p247 = pneg %p57
        %p248 = pneg %p81
        %p249 = pneg %p78
        %p250 = pneg %p102
        %p251 = pneg %p99
        %p252 = pneg %p123
        %p253 = pneg %p120
        %p254 = pneg %p149
        %p255 = pneg %p146
        %p256 = scmp.lt.s32.totalorder %s18, 1
        %s257 = scalar_select %p256, %s18, 1
        %s258 = smul.addr %s257, 32
        %s259 = smul.addr %s258, 8
        %s260 = scalar_lea.vmem %s5, %s259
        %p261 = scmp.lt.s32.totalorder %s18, 1
        %s262 = scalar_select %p261, %s18, 1
        %s263 = smul.addr %s262, 32
        %s264 = smul.addr %s263, 8
        %s265 = scalar_lea.vmem %s0, %s264
        %p266 = scmp.lt.s32.totalorder %s18, 1
        %s267 = scalar_select %p266, %s18, 1
        %s268 = smul.addr %s267, 32
        %s269 = smul.addr %s268, 8
        %s270 = scalar_lea.vmem %s5, %s269
        %v272 = vld [vmem:[%s265] sm:$0xff]
        %v273 = vld [vmem:[%s265 + $0x8] sm:$0xff]
        %v274 = vld [vmem:[%s265 + $0x10] sm:$0xff]
        %v275 = vld [vmem:[%s265 + $0x18] sm:$0xff]
        %v276 = vld [vmem:[%s265 + $0x20] sm:$0xff]
        %v277 = vld [vmem:[%s265 + $0x28] sm:$0xff]
        %v278 = vld [vmem:[%s265 + $0x30] sm:$0xff]
        %v279 = vld [vmem:[%s265 + $0x38] sm:$0xff]
        %v280 = vld [vmem:[%s265 + $0x40] sm:$0xff]
        %v281 = vld [vmem:[%s265 + $0x48] sm:$0xff]
        %v282 = vld [vmem:[%s265 + $0x50] sm:$0xff]
        %v283 = vld [vmem:[%s265 + $0x58] sm:$0xff]
        %v284 = vld [vmem:[%s265 + $0x60] sm:$0xff]
        %v285 = vld [vmem:[%s265 + $0x68] sm:$0xff]
        %v286 = vld [vmem:[%s265 + $0x70] sm:$0xff]
        %v287 = vld [vmem:[%s265 + $0x78] sm:$0xff]
        %v288 = vld [vmem:[%s265 + $0x80] sm:$0xff]
        %v289 = vld [vmem:[%s265 + $0x88] sm:$0xff]
        %v290 = vld [vmem:[%s265 + $0x90] sm:$0xff]
        %v291 = vld [vmem:[%s265 + $0x98] sm:$0xff]
        %v292 = vld [vmem:[%s265 + $0xa0] sm:$0xff]
        %v293 = vld [vmem:[%s265 + $0xa8] sm:$0xff]
        %v294 = vld [vmem:[%s265 + $0xb0] sm:$0xff]
        %v295 = vld [vmem:[%s265 + $0xb8] sm:$0xff]
        %v296 = vld [vmem:[%s265 + $0xc0] sm:$0xff]
        %v297 = vld [vmem:[%s265 + $0xc8] sm:$0xff]
        %v298 = vld [vmem:[%s265 + $0xd0] sm:$0xff]
        %v299 = vld [vmem:[%s265 + $0xd8] sm:$0xff]
        %v300 = vld [vmem:[%s265 + $0xe0] sm:$0xff]
        %v301 = vld [vmem:[%s265 + $0xe8] sm:$0xff]
        %v302 = vld [vmem:[%s265 + $0xf0] sm:$0xff]
        %v303 = vld [vmem:[%s265 + $0xf8] sm:$0xff]
        %v304 = vpack.c.bf16 %v272, %v272
        %v305 = vpack.c.bf16 %v273, %v273
        %v306 = vpack.c.bf16 %v274, %v274
        %v307 = vpack.c.bf16 %v275, %v275
        %v308 = vpack.c.bf16 %v276, %v276
        %v309 = vpack.c.bf16 %v277, %v277
        %v310 = vpack.c.bf16 %v278, %v278
        %v311 = vpack.c.bf16 %v279, %v279
        %v312 = vpack.c.bf16 %v280, %v280
        %v313 = vpack.c.bf16 %v281, %v281
        %v314 = vpack.c.bf16 %v282, %v282
        %v315 = vpack.c.bf16 %v283, %v283
        %v316 = vpack.c.bf16 %v284, %v284
        %v317 = vpack.c.bf16 %v285, %v285
        %v318 = vpack.c.bf16 %v286, %v286
        %v319 = vpack.c.bf16 %v287, %v287
        %v320 = vpack.c.bf16 %v288, %v288
        %v321 = vpack.c.bf16 %v289, %v289
        %v322 = vpack.c.bf16 %v290, %v290
        %v323 = vpack.c.bf16 %v291, %v291
        %v324 = vpack.c.bf16 %v292, %v292
        %v325 = vpack.c.bf16 %v293, %v293
        %v326 = vpack.c.bf16 %v294, %v294
        %v327 = vpack.c.bf16 %v295, %v295
        %v328 = vpack.c.bf16 %v296, %v296
        %v329 = vpack.c.bf16 %v297, %v297
        %v330 = vpack.c.bf16 %v298, %v298
        %v331 = vpack.c.bf16 %v299, %v299
        %v332 = vpack.c.bf16 %v300, %v300
        %v333 = vpack.c.bf16 %v301, %v301
        %v334 = vpack.c.bf16 %v302, %v302
        %v335 = vpack.c.bf16 %v303, %v303
        %v368 = vunpack.c.l.b16 %v304
        %v369 = vunpack.c.l.b16 %v305
        %v370 = vunpack.c.l.b16 %v306
        %v371 = vunpack.c.l.b16 %v307
        %v372 = vunpack.c.l.b16 %v308
        %v373 = vunpack.c.l.b16 %v309
        %v374 = vunpack.c.l.b16 %v310
        %v375 = vunpack.c.l.b16 %v311
        %v376 = vunpack.c.l.b16 %v312
        %v377 = vunpack.c.l.b16 %v313
        %v378 = vunpack.c.l.b16 %v314
        %v379 = vunpack.c.l.b16 %v315
        %v380 = vunpack.c.l.b16 %v316
        %v381 = vunpack.c.l.b16 %v317
        %v382 = vunpack.c.l.b16 %v318
        %v383 = vunpack.c.l.b16 %v319
        %v384 = vunpack.c.l.b16 %v320
        %v385 = vunpack.c.l.b16 %v321
        %v386 = vunpack.c.l.b16 %v322
        %v387 = vunpack.c.l.b16 %v323
        %v388 = vunpack.c.l.b16 %v324
        %v389 = vunpack.c.l.b16 %v325
        %v390 = vunpack.c.l.b16 %v326
        %v391 = vunpack.c.l.b16 %v327
        %v392 = vunpack.c.l.b16 %v328
        %v393 = vunpack.c.l.b16 %v329
        %v394 = vunpack.c.l.b16 %v330
        %v395 = vunpack.c.l.b16 %v331
        %v396 = vunpack.c.l.b16 %v332
        %v397 = vunpack.c.l.b16 %v333
        %v398 = vunpack.c.l.b16 %v334
        %v399 = vunpack.c.l.b16 %v335
        %v400 = vpack.c.b16 %v369, %v368
        %v401 = vpack.c.b16 %v371, %v370
        %v402 = vpack.c.b16 %v373, %v372
        %v403 = vpack.c.b16 %v375, %v374
        %v404 = vpack.c.b16 %v377, %v376
        %v405 = vpack.c.b16 %v379, %v378
        %v406 = vpack.c.b16 %v381, %v380
        %v407 = vpack.c.b16 %v383, %v382
        %v408 = vpack.c.b16 %v385, %v384
        %v409 = vpack.c.b16 %v387, %v386
        %v410 = vpack.c.b16 %v389, %v388
        %v411 = vpack.c.b16 %v391, %v390
        %v412 = vpack.c.b16 %v393, %v392
        %v413 = vpack.c.b16 %v395, %v394
        %v414 = vpack.c.b16 %v397, %v396
        %v415 = vpack.c.b16 %v399, %v398
        %v417 = vshrl.u32 0, 16
        %v419 = vrot.slane %v417, 7
        %v420 = vshll.u32 0, 16
        %v422 = vor.u32 %v419, %v420
        %v424 = vshrl.u32 %v400, 16
        %v426 = vrot.slane %v424, 7
        %v427 = vshll.u32 %v400, 16
        %v429 = vor.u32 %v426, %v427
        %v431 = vshrl.u32 %v401, 16
        %v433 = vrot.slane %v431, 7
        %v434 = vshll.u32 %v401, 16
        %v436 = vor.u32 %v433, %v434
        %v438 = vshrl.u32 %v402, 16
        %v440 = vrot.slane %v438, 7
        %v441 = vshll.u32 %v402, 16
        %v443 = vor.u32 %v440, %v441
        %v445 = vshrl.u32 %v403, 16
        %v447 = vrot.slane %v445, 7
        %v448 = vshll.u32 %v403, 16
        %v450 = vor.u32 %v447, %v448
        %v452 = vshrl.u32 %v404, 16
        %v454 = vrot.slane %v452, 7
        %v455 = vshll.u32 %v404, 16
        %v457 = vor.u32 %v454, %v455
        %v459 = vshrl.u32 %v405, 16
        %v461 = vrot.slane %v459, 7
        %v462 = vshll.u32 %v405, 16
        %v464 = vor.u32 %v461, %v462
        %v466 = vshrl.u32 %v406, 16
        %v468 = vrot.slane %v466, 7
        %v469 = vshll.u32 %v406, 16
        %v471 = vor.u32 %v468, %v469
        %v473 = vshrl.u32 %v407, 16
        %v475 = vrot.slane %v473, 7
        %v476 = vshll.u32 %v407, 16
        %v478 = vor.u32 %v475, %v476
        %v480 = vshrl.u32 %v408, 16
        %v482 = vrot.slane %v480, 7
        %v483 = vshll.u32 %v408, 16
        %v485 = vor.u32 %v482, %v483
        %v487 = vshrl.u32 %v409, 16
        %v489 = vrot.slane %v487, 7
        %v490 = vshll.u32 %v409, 16
        %v492 = vor.u32 %v489, %v490
        %v494 = vshrl.u32 %v410, 16
        %v496 = vrot.slane %v494, 7
        %v497 = vshll.u32 %v410, 16
        %v499 = vor.u32 %v496, %v497
        %v501 = vshrl.u32 %v411, 16
        %v503 = vrot.slane %v501, 7
        %v504 = vshll.u32 %v411, 16
        %v506 = vor.u32 %v503, %v504
        %v508 = vshrl.u32 %v412, 16
        %v510 = vrot.slane %v508, 7
        %v511 = vshll.u32 %v412, 16
        %v513 = vor.u32 %v510, %v511
        %v515 = vshrl.u32 %v413, 16
        %v517 = vrot.slane %v515, 7
        %v518 = vshll.u32 %v413, 16
        %v520 = vor.u32 %v517, %v518
        %v522 = vshrl.u32 %v414, 16
        %v524 = vrot.slane %v522, 7
        %v525 = vshll.u32 %v414, 16
        %v527 = vor.u32 %v524, %v525
        %v529 = vshrl.u32 %v415, 16
        %v531 = vrot.slane %v529, 7
        %v532 = vshll.u32 %v415, 16
        %v534 = vor.u32 %v531, %v532
        %vm569 = vcmask 1040384
        %vm570 = vsmask.f32 256
        %vm571 = vmand %vm569, %vm570
        %v572 = vsel %vm571, 0, %v422
        %v573 = vsel %vm571, 0, %v429
        %v574 = vsel %vm571, 0, %v436
        %v575 = vsel %vm571, 0, %v443
        %v576 = vsel %vm571, 0, %v450
        %v577 = vsel %vm571, 0, %v457
        %v578 = vsel %vm571, 0, %v464
        %v579 = vsel %vm571, 0, %v471
        %v580 = vsel %vm571, 0, %v478
        %v581 = vsel %vm571, 0, %v485
        %v582 = vsel %vm571, 0, %v492
        %v583 = vsel %vm571, 0, %v499
        %v584 = vsel %vm571, 0, %v506
        %v585 = vsel %vm571, 0, %v513
        %v586 = vsel %vm571, 0, %v520
        %v587 = vsel %vm571, 0, %v527
        %v588 = vsel %vm571, 0, %v534
        %v589 = vsel %vm571, %v419, 0
        %v590 = vsel %vm571, %v426, 0
        %v591 = vsel %vm571, %v433, 0
        %v592 = vsel %vm571, %v440, 0
        %v593 = vsel %vm571, %v447, 0
        %v594 = vsel %vm571, %v454, 0
        %v595 = vsel %vm571, %v461, 0
        %v596 = vsel %vm571, %v468, 0
        %v597 = vsel %vm571, %v475, 0
        %v598 = vsel %vm571, %v482, 0
        %v599 = vsel %vm571, %v489, 0
        %v600 = vsel %vm571, %v496, 0
        %v601 = vsel %vm571, %v503, 0
        %v602 = vsel %vm571, %v510, 0
        %v603 = vsel %vm571, %v517, 0
        %v604 = vsel %vm571, %v524, 0
        %v605 = vsel %vm571, %v531, 0
        %vm606 = vsmask.f32 7424
        %v608 = vshrl.u32 %v572, 16
        %v610 = vshll.u32 %v572, 16
        %v612 = vrot.slane %v610, 1
        %v613 = vor.u32 %v608, %v612
        %v615 = vshll.u32 %v589, 16
        %v617 = vrot.slane %v615, 1
        %v618 = vsel %vm606, %v613, %v617
        %v620 = vshrl.u32 %v573, 16
        %v622 = vshll.u32 %v573, 16
        %v624 = vrot.slane %v622, 1
        %v625 = vor.u32 %v620, %v624
        %v627 = vshll.u32 %v590, 16
        %v629 = vrot.slane %v627, 1
        %v630 = vsel %vm606, %v625, %v629
        %v632 = vshrl.u32 %v574, 16
        %v634 = vshll.u32 %v574, 16
        %v636 = vrot.slane %v634, 1
        %v637 = vor.u32 %v632, %v636
        %v639 = vshll.u32 %v591, 16
        %v641 = vrot.slane %v639, 1
        %v642 = vsel %vm606, %v637, %v641
        %v644 = vshrl.u32 %v575, 16
        %v646 = vshll.u32 %v575, 16
        %v648 = vrot.slane %v646, 1
        %v649 = vor.u32 %v644, %v648
        %v651 = vshll.u32 %v592, 16
        %v653 = vrot.slane %v651, 1
        %v654 = vsel %vm606, %v649, %v653
        %v656 = vshrl.u32 %v576, 16
        %v658 = vshll.u32 %v576, 16
        %v660 = vrot.slane %v658, 1
        %v661 = vor.u32 %v656, %v660
        %v663 = vshll.u32 %v593, 16
        %v665 = vrot.slane %v663, 1
        %v666 = vsel %vm606, %v661, %v665
        %v668 = vshrl.u32 %v577, 16
        %v670 = vshll.u32 %v577, 16
        %v672 = vrot.slane %v670, 1
        %v673 = vor.u32 %v668, %v672
        %v675 = vshll.u32 %v594, 16
        %v677 = vrot.slane %v675, 1
        %v678 = vsel %vm606, %v673, %v677
        %v680 = vshrl.u32 %v578, 16
        %v682 = vshll.u32 %v578, 16
        %v684 = vrot.slane %v682, 1
        %v685 = vor.u32 %v680, %v684
        %v687 = vshll.u32 %v595, 16
        %v689 = vrot.slane %v687, 1
        %v690 = vsel %vm606, %v685, %v689
        %v692 = vshrl.u32 %v579, 16
        %v694 = vshll.u32 %v579, 16
        %v696 = vrot.slane %v694, 1
        %v697 = vor.u32 %v692, %v696
        %v699 = vshll.u32 %v596, 16
        %v701 = vrot.slane %v699, 1
        %v702 = vsel %vm606, %v697, %v701
        %v704 = vshrl.u32 %v580, 16
        %v706 = vshll.u32 %v580, 16
        %v708 = vrot.slane %v706, 1
        %v709 = vor.u32 %v704, %v708
        %v711 = vshll.u32 %v597, 16
        %v713 = vrot.slane %v711, 1
        %v714 = vsel %vm606, %v709, %v713
        %v716 = vshrl.u32 %v581, 16
        %v718 = vshll.u32 %v581, 16
        %v720 = vrot.slane %v718, 1
        %v721 = vor.u32 %v716, %v720
        %v723 = vshll.u32 %v598, 16
        %v725 = vrot.slane %v723, 1
        %v726 = vsel %vm606, %v721, %v725
        %v728 = vshrl.u32 %v582, 16
        %v730 = vshll.u32 %v582, 16
        %v732 = vrot.slane %v730, 1
        %v733 = vor.u32 %v728, %v732
        %v735 = vshll.u32 %v599, 16
        %v737 = vrot.slane %v735, 1
        %v738 = vsel %vm606, %v733, %v737
        %v740 = vshrl.u32 %v583, 16
        %v742 = vshll.u32 %v583, 16
        %v744 = vrot.slane %v742, 1
        %v745 = vor.u32 %v740, %v744
        %v747 = vshll.u32 %v600, 16
        %v749 = vrot.slane %v747, 1
        %v750 = vsel %vm606, %v745, %v749
        %v752 = vshrl.u32 %v584, 16
        %v754 = vshll.u32 %v584, 16
        %v756 = vrot.slane %v754, 1
        %v757 = vor.u32 %v752, %v756
        %v759 = vshll.u32 %v601, 16
        %v761 = vrot.slane %v759, 1
        %v762 = vsel %vm606, %v757, %v761
        %v764 = vshrl.u32 %v585, 16
        %v766 = vshll.u32 %v585, 16
        %v768 = vrot.slane %v766, 1
        %v769 = vor.u32 %v764, %v768
        %v771 = vshll.u32 %v602, 16
        %v773 = vrot.slane %v771, 1
        %v774 = vsel %vm606, %v769, %v773
        %v776 = vshrl.u32 %v586, 16
        %v778 = vshll.u32 %v586, 16
        %v780 = vrot.slane %v778, 1
        %v781 = vor.u32 %v776, %v780
        %v783 = vshll.u32 %v603, 16
        %v785 = vrot.slane %v783, 1
        %v786 = vsel %vm606, %v781, %v785
        %v788 = vshrl.u32 %v587, 16
        %v790 = vshll.u32 %v587, 16
        %v792 = vrot.slane %v790, 1
        %v793 = vor.u32 %v788, %v792
        %v795 = vshll.u32 %v604, 16
        %v797 = vrot.slane %v795, 1
        %v798 = vsel %vm606, %v793, %v797
        %799 = vrot.lane.b32.xlu0 %v618, 4
        %v800 = vpop.permute.xlu0 %799
        %801 = vrot.lane.b32.xlu0 %v630, 4
        %v802 = vpop.permute.xlu0 %801
        %803 = vrot.lane.b32.xlu0 %v642, 4
        %v804 = vpop.permute.xlu0 %803
        %805 = vrot.lane.b32.xlu0 %v654, 4
        %v806 = vpop.permute.xlu0 %805
        %807 = vrot.lane.b32.xlu0 %v666, 4
        %v808 = vpop.permute.xlu0 %807
        %809 = vrot.lane.b32.xlu0 %v678, 4
        %v810 = vpop.permute.xlu0 %809
        %811 = vrot.lane.b32.xlu0 %v690, 4
        %v812 = vpop.permute.xlu0 %811
        %813 = vrot.lane.b32.xlu0 %v702, 4
        %v814 = vpop.permute.xlu0 %813
        %815 = vrot.lane.b32.xlu0 %v714, 4
        %v816 = vpop.permute.xlu0 %815
        %817 = vrot.lane.b32.xlu0 %v726, 4
        %v818 = vpop.permute.xlu0 %817
        %819 = vrot.lane.b32.xlu0 %v738, 4
        %v820 = vpop.permute.xlu0 %819
        %821 = vrot.lane.b32.xlu0 %v750, 4
        %v822 = vpop.permute.xlu0 %821
        %823 = vrot.lane.b32.xlu0 %v762, 4
        %v824 = vpop.permute.xlu0 %823
        %825 = vrot.lane.b32.xlu0 %v774, 4
        %v826 = vpop.permute.xlu0 %825
        %827 = vrot.lane.b32.xlu0 %v786, 4
        %v828 = vpop.permute.xlu0 %827
        %829 = vrot.lane.b32.xlu0 %v798, 4
        %v830 = vpop.permute.xlu0 %829
        %vm863 = vcmask 1046528
        %v864 = vrot.slane %v572, 1
        %v865 = vrot.slane %v589, 1
        %v866 = vsel %vm863, %v864, %v865
        %v867 = vrot.slane %v573, 1
        %v868 = vrot.slane %v590, 1
        %v869 = vsel %vm863, %v867, %v868
        %v870 = vrot.slane %v574, 1
        %v871 = vrot.slane %v591, 1
        %v872 = vsel %vm863, %v870, %v871
        %v873 = vrot.slane %v575, 1
        %v874 = vrot.slane %v592, 1
        %v875 = vsel %vm863, %v873, %v874
        %v876 = vrot.slane %v576, 1
        %v877 = vrot.slane %v593, 1
        %v878 = vsel %vm863, %v876, %v877
        %v879 = vrot.slane %v577, 1
        %v880 = vrot.slane %v594, 1
        %v881 = vsel %vm863, %v879, %v880
        %v882 = vrot.slane %v578, 1
        %v883 = vrot.slane %v595, 1
        %v884 = vsel %vm863, %v882, %v883
        %v885 = vrot.slane %v579, 1
        %v886 = vrot.slane %v596, 1
        %v887 = vsel %vm863, %v885, %v886
        %v888 = vrot.slane %v580, 1
        %v889 = vrot.slane %v597, 1
        %v890 = vsel %vm863, %v888, %v889
        %v891 = vrot.slane %v581, 1
        %v892 = vrot.slane %v598, 1
        %v893 = vsel %vm863, %v891, %v892
        %v894 = vrot.slane %v582, 1
        %v895 = vrot.slane %v599, 1
        %v896 = vsel %vm863, %v894, %v895
        %v897 = vrot.slane %v583, 1
        %v898 = vrot.slane %v600, 1
        %v899 = vsel %vm863, %v897, %v898
        %v900 = vrot.slane %v584, 1
        %v901 = vrot.slane %v601, 1
        %v902 = vsel %vm863, %v900, %v901
        %v903 = vrot.slane %v585, 1
        %v904 = vrot.slane %v602, 1
        %v905 = vsel %vm863, %v903, %v904
        %v906 = vrot.slane %v586, 1
        %v907 = vrot.slane %v603, 1
        %v908 = vsel %vm863, %v906, %v907
        %v909 = vrot.slane %v587, 1
        %v910 = vrot.slane %v604, 1
        %v911 = vsel %vm863, %v909, %v910
        %912 = vrot.lane.b32.xlu0 %v866, 8
        %v913 = vpop.permute.xlu0 %912
        %914 = vrot.lane.b32.xlu0 %v869, 8
        %v915 = vpop.permute.xlu0 %914
        %916 = vrot.lane.b32.xlu0 %v872, 8
        %v917 = vpop.permute.xlu0 %916
        %918 = vrot.lane.b32.xlu0 %v875, 8
        %v919 = vpop.permute.xlu0 %918
        %920 = vrot.lane.b32.xlu0 %v878, 8
        %v921 = vpop.permute.xlu0 %920
        %922 = vrot.lane.b32.xlu0 %v881, 8
        %v923 = vpop.permute.xlu0 %922
        %924 = vrot.lane.b32.xlu0 %v884, 8
        %v925 = vpop.permute.xlu0 %924
        %926 = vrot.lane.b32.xlu0 %v887, 8
        %v927 = vpop.permute.xlu0 %926
        %928 = vrot.lane.b32.xlu0 %v890, 8
        %v929 = vpop.permute.xlu0 %928
        %930 = vrot.lane.b32.xlu0 %v893, 8
        %v931 = vpop.permute.xlu0 %930
        %932 = vrot.lane.b32.xlu0 %v896, 8
        %v933 = vpop.permute.xlu0 %932
        %934 = vrot.lane.b32.xlu0 %v899, 8
        %v935 = vpop.permute.xlu0 %934
        %936 = vrot.lane.b32.xlu0 %v902, 8
        %v937 = vpop.permute.xlu0 %936
        %938 = vrot.lane.b32.xlu0 %v905, 8
        %v939 = vpop.permute.xlu0 %938
        %940 = vrot.lane.b32.xlu0 %v908, 8
        %v941 = vpop.permute.xlu0 %940
        %942 = vrot.lane.b32.xlu0 %v911, 8
        %v943 = vpop.permute.xlu0 %942
        %945 = vrot.lane.b32.xlu0 %v573, 12
        %v946 = vpop.permute.xlu0 %945
        %947 = vrot.lane.b32.xlu0 %v574, 12
        %v948 = vpop.permute.xlu0 %947
        %949 = vrot.lane.b32.xlu0 %v575, 12
        %v950 = vpop.permute.xlu0 %949
        %951 = vrot.lane.b32.xlu0 %v576, 12
        %v952 = vpop.permute.xlu0 %951
        %953 = vrot.lane.b32.xlu0 %v577, 12
        %v954 = vpop.permute.xlu0 %953
        %955 = vrot.lane.b32.xlu0 %v578, 12
        %v956 = vpop.permute.xlu0 %955
        %957 = vrot.lane.b32.xlu0 %v579, 12
        %v958 = vpop.permute.xlu0 %957
        %959 = vrot.lane.b32.xlu0 %v580, 12
        %v960 = vpop.permute.xlu0 %959
        %961 = vrot.lane.b32.xlu0 %v581, 12
        %v962 = vpop.permute.xlu0 %961
        %963 = vrot.lane.b32.xlu0 %v582, 12
        %v964 = vpop.permute.xlu0 %963
        %965 = vrot.lane.b32.xlu0 %v583, 12
        %v966 = vpop.permute.xlu0 %965
        %967 = vrot.lane.b32.xlu0 %v584, 12
        %v968 = vpop.permute.xlu0 %967
        %969 = vrot.lane.b32.xlu0 %v585, 12
        %v970 = vpop.permute.xlu0 %969
        %971 = vrot.lane.b32.xlu0 %v586, 12
        %v972 = vpop.permute.xlu0 %971
        %973 = vrot.lane.b32.xlu0 %v587, 12
        %v974 = vpop.permute.xlu0 %973
        %975 = vrot.lane.b32.xlu0 %v588, 12
        %v976 = vpop.permute.xlu0 %975
        %v978 = vshrl.u32 %v588, 16
        %v980 = vshll.u32 %v588, 16
        %v982 = vrot.slane %v980, 1
        %v983 = vor.u32 %v978, %v982
        %v985 = vshll.u32 %v605, 16
        %v987 = vrot.slane %v985, 1
        %v988 = vsel %vm606, %v983, %v987
        %989 = vrot.lane.b32.xlu0 %v630, 16
        %v990 = vpop.permute.xlu0 %989
        %991 = vrot.lane.b32.xlu0 %v642, 16
        %v992 = vpop.permute.xlu0 %991
        %993 = vrot.lane.b32.xlu0 %v654, 16
        %v994 = vpop.permute.xlu0 %993
        %995 = vrot.lane.b32.xlu0 %v666, 16
        %v996 = vpop.permute.xlu0 %995
        %997 = vrot.lane.b32.xlu0 %v678, 16
        %v998 = vpop.permute.xlu0 %997
        %999 = vrot.lane.b32.xlu0 %v690, 16
        %v1000 = vpop.permute.xlu0 %999
        %1001 = vrot.lane.b32.xlu0 %v702, 16
        %v1002 = vpop.permute.xlu0 %1001
        %1003 = vrot.lane.b32.xlu0 %v714, 16
        %v1004 = vpop.permute.xlu0 %1003
        %1005 = vrot.lane.b32.xlu0 %v726, 16
        %v1006 = vpop.permute.xlu0 %1005
        %1007 = vrot.lane.b32.xlu0 %v738, 16
        %v1008 = vpop.permute.xlu0 %1007
        %1009 = vrot.lane.b32.xlu0 %v750, 16
        %v1010 = vpop.permute.xlu0 %1009
        %1011 = vrot.lane.b32.xlu0 %v762, 16
        %v1012 = vpop.permute.xlu0 %1011
        %1013 = vrot.lane.b32.xlu0 %v774, 16
        %v1014 = vpop.permute.xlu0 %1013
        %1015 = vrot.lane.b32.xlu0 %v786, 16
        %v1016 = vpop.permute.xlu0 %1015
        %1017 = vrot.lane.b32.xlu0 %v798, 16
        %v1018 = vpop.permute.xlu0 %1017
        %1019 = vrot.lane.b32.xlu0 %v988, 16
        %v1020 = vpop.permute.xlu0 %1019
        %v1022 = vrot.slane %v588, 1
        %v1023 = vrot.slane %v605, 1
        %v1024 = vsel %vm863, %v1022, %v1023
        %1025 = vrot.lane.b32.xlu0 %v869, 20
        %v1026 = vpop.permute.xlu0 %1025
        %1027 = vrot.lane.b32.xlu0 %v872, 20
        %v1028 = vpop.permute.xlu0 %1027
        %1029 = vrot.lane.b32.xlu0 %v875, 20
        %v1030 = vpop.permute.xlu0 %1029
        %1031 = vrot.lane.b32.xlu0 %v878, 20
        %v1032 = vpop.permute.xlu0 %1031
        %1033 = vrot.lane.b32.xlu0 %v881, 20
        %v1034 = vpop.permute.xlu0 %1033
        %1035 = vrot.lane.b32.xlu0 %v884, 20
        %v1036 = vpop.permute.xlu0 %1035
        %1037 = vrot.lane.b32.xlu0 %v887, 20
        %v1038 = vpop.permute.xlu0 %1037
        %1039 = vrot.lane.b32.xlu0 %v890, 20
        %v1040 = vpop.permute.xlu0 %1039
        %1041 = vrot.lane.b32.xlu0 %v893, 20
        %v1042 = vpop.permute.xlu0 %1041
        %1043 = vrot.lane.b32.xlu0 %v896, 20
        %v1044 = vpop.permute.xlu0 %1043
        %1045 = vrot.lane.b32.xlu0 %v899, 20
        %v1046 = vpop.permute.xlu0 %1045
        %1047 = vrot.lane.b32.xlu0 %v902, 20
        %v1048 = vpop.permute.xlu0 %1047
        %1049 = vrot.lane.b32.xlu0 %v905, 20
        %v1050 = vpop.permute.xlu0 %1049
        %1051 = vrot.lane.b32.xlu0 %v908, 20
        %v1052 = vpop.permute.xlu0 %1051
        %1053 = vrot.lane.b32.xlu0 %v911, 20
        %v1054 = vpop.permute.xlu0 %1053
        %1055 = vrot.lane.b32.xlu0 %v1024, 20
        %v1056 = vpop.permute.xlu0 %1055
        %1057 = vrot.lane.b32.xlu0 %v574, 24
        %v1058 = vpop.permute.xlu0 %1057
        %1059 = vrot.lane.b32.xlu0 %v575, 24
        %v1060 = vpop.permute.xlu0 %1059
        %1061 = vrot.lane.b32.xlu0 %v576, 24
        %v1062 = vpop.permute.xlu0 %1061
        %1063 = vrot.lane.b32.xlu0 %v577, 24
        %v1064 = vpop.permute.xlu0 %1063
        %1065 = vrot.lane.b32.xlu0 %v578, 24
        %v1066 = vpop.permute.xlu0 %1065
        %1067 = vrot.lane.b32.xlu0 %v579, 24
        %v1068 = vpop.permute.xlu0 %1067
        %1069 = vrot.lane.b32.xlu0 %v580, 24
        %v1070 = vpop.permute.xlu0 %1069
        %1071 = vrot.lane.b32.xlu0 %v581, 24
        %v1072 = vpop.permute.xlu0 %1071
        %1073 = vrot.lane.b32.xlu0 %v582, 24
        %v1074 = vpop.permute.xlu0 %1073
        %1075 = vrot.lane.b32.xlu0 %v583, 24
        %v1076 = vpop.permute.xlu0 %1075
        %1077 = vrot.lane.b32.xlu0 %v584, 24
        %v1078 = vpop.permute.xlu0 %1077
        %1079 = vrot.lane.b32.xlu0 %v585, 24
        %v1080 = vpop.permute.xlu0 %1079
        %1081 = vrot.lane.b32.xlu0 %v586, 24
        %v1082 = vpop.permute.xlu0 %1081
        %1083 = vrot.lane.b32.xlu0 %v587, 24
        %v1084 = vpop.permute.xlu0 %1083
        %1085 = vrot.lane.b32.xlu0 %v588, 24
        %v1086 = vpop.permute.xlu0 %1085
        %1087 = vrot.lane.b32.xlu0 %v572, 24
        %v1088 = vpop.permute.xlu0 %1087
        %1089 = vrot.lane.b32.xlu0 %v642, 28
        %v1090 = vpop.permute.xlu0 %1089
        %1091 = vrot.lane.b32.xlu0 %v654, 28
        %v1092 = vpop.permute.xlu0 %1091
        %1093 = vrot.lane.b32.xlu0 %v666, 28
        %v1094 = vpop.permute.xlu0 %1093
        %1095 = vrot.lane.b32.xlu0 %v678, 28
        %v1096 = vpop.permute.xlu0 %1095
        %1097 = vrot.lane.b32.xlu0 %v690, 28
        %v1098 = vpop.permute.xlu0 %1097
        %1099 = vrot.lane.b32.xlu0 %v702, 28
        %v1100 = vpop.permute.xlu0 %1099
        %1101 = vrot.lane.b32.xlu0 %v714, 28
        %v1102 = vpop.permute.xlu0 %1101
        %1103 = vrot.lane.b32.xlu0 %v726, 28
        %v1104 = vpop.permute.xlu0 %1103
        %1105 = vrot.lane.b32.xlu0 %v738, 28
        %v1106 = vpop.permute.xlu0 %1105
        %1107 = vrot.lane.b32.xlu0 %v750, 28
        %v1108 = vpop.permute.xlu0 %1107
        %1109 = vrot.lane.b32.xlu0 %v762, 28
        %v1110 = vpop.permute.xlu0 %1109
        %1111 = vrot.lane.b32.xlu0 %v774, 28
        %v1112 = vpop.permute.xlu0 %1111
        %1113 = vrot.lane.b32.xlu0 %v786, 28
        %v1114 = vpop.permute.xlu0 %1113
        %1115 = vrot.lane.b32.xlu0 %v798, 28
        %v1116 = vpop.permute.xlu0 %1115
        %1117 = vrot.lane.b32.xlu0 %v988, 28
        %v1118 = vpop.permute.xlu0 %1117
        %1119 = vrot.lane.b32.xlu0 %v618, 28
        %v1120 = vpop.permute.xlu0 %1119
        %1121 = vrot.lane.b32.xlu0 %v872, 32
        %v1122 = vpop.permute.xlu0 %1121
        %1123 = vrot.lane.b32.xlu0 %v875, 32
        %v1124 = vpop.permute.xlu0 %1123
        %1125 = vrot.lane.b32.xlu0 %v878, 32
        %v1126 = vpop.permute.xlu0 %1125
        %1127 = vrot.lane.b32.xlu0 %v881, 32
        %v1128 = vpop.permute.xlu0 %1127
        %1129 = vrot.lane.b32.xlu0 %v884, 32
        %v1130 = vpop.permute.xlu0 %1129
        %1131 = vrot.lane.b32.xlu0 %v887, 32
        %v1132 = vpop.permute.xlu0 %1131
        %1133 = vrot.lane.b32.xlu0 %v890, 32
        %v1134 = vpop.permute.xlu0 %1133
        %1135 = vrot.lane.b32.xlu0 %v893, 32
        %v1136 = vpop.permute.xlu0 %1135
        %1137 = vrot.lane.b32.xlu0 %v896, 32
        %v1138 = vpop.permute.xlu0 %1137
        %1139 = vrot.lane.b32.xlu0 %v899, 32
        %v1140 = vpop.permute.xlu0 %1139
        %1141 = vrot.lane.b32.xlu0 %v902, 32
        %v1142 = vpop.permute.xlu0 %1141
        %1143 = vrot.lane.b32.xlu0 %v905, 32
        %v1144 = vpop.permute.xlu0 %1143
        %1145 = vrot.lane.b32.xlu0 %v908, 32
        %v1146 = vpop.permute.xlu0 %1145
        %1147 = vrot.lane.b32.xlu0 %v911, 32
        %v1148 = vpop.permute.xlu0 %1147
        %1149 = vrot.lane.b32.xlu0 %v1024, 32
        %v1150 = vpop.permute.xlu0 %1149
        %1151 = vrot.lane.b32.xlu0 %v866, 32
        %v1152 = vpop.permute.xlu0 %1151
        %vm1153 = vcmask 31744
        %v1155 = vsel %vm1153, %v572, %v800
        %v1157 = vsel %vm1153, %v573, %v802
        %v1159 = vsel %vm1153, %v574, %v804
        %v1161 = vsel %vm1153, %v575, %v806
        %v1163 = vsel %vm1153, %v576, %v808
        %v1165 = vsel %vm1153, %v577, %v810
        %v1167 = vsel %vm1153, %v578, %v812
        %v1169 = vsel %vm1153, %v579, %v814
        %v1171 = vsel %vm1153, %v580, %v816
        %v1173 = vsel %vm1153, %v581, %v818
        %v1175 = vsel %vm1153, %v582, %v820
        %v1177 = vsel %vm1153, %v583, %v822
        %v1179 = vsel %vm1153, %v584, %v824
        %v1181 = vsel %vm1153, %v585, %v826
        %v1183 = vsel %vm1153, %v586, %v828
        %v1185 = vsel %vm1153, %v587, %v830
        %vm1186 = vcmask 64512
        %v1188 = vsel %vm1186, %v1155, %v913
        %v1190 = vsel %vm1186, %v1157, %v915
        %v1192 = vsel %vm1186, %v1159, %v917
        %v1194 = vsel %vm1186, %v1161, %v919
        %v1196 = vsel %vm1186, %v1163, %v921
        %v1198 = vsel %vm1186, %v1165, %v923
        %v1200 = vsel %vm1186, %v1167, %v925
        %v1202 = vsel %vm1186, %v1169, %v927
        %v1204 = vsel %vm1186, %v1171, %v929
        %v1206 = vsel %vm1186, %v1173, %v931
        %v1208 = vsel %vm1186, %v1175, %v933
        %v1210 = vsel %vm1186, %v1177, %v935
        %v1212 = vsel %vm1186, %v1179, %v937
        %v1214 = vsel %vm1186, %v1181, %v939
        %v1216 = vsel %vm1186, %v1183, %v941
        %v1218 = vsel %vm1186, %v1185, %v943
        %vm1219 = vcmask 97280
        %v1221 = vsel %vm1219, %v1188, %v946
        %v1223 = vsel %vm1219, %v1190, %v948
        %v1225 = vsel %vm1219, %v1192, %v950
        %v1227 = vsel %vm1219, %v1194, %v952
        %v1229 = vsel %vm1219, %v1196, %v954
        %v1231 = vsel %vm1219, %v1198, %v956
        %v1233 = vsel %vm1219, %v1200, %v958
        %v1235 = vsel %vm1219, %v1202, %v960
        %v1237 = vsel %vm1219, %v1204, %v962
        %v1239 = vsel %vm1219, %v1206, %v964
        %v1241 = vsel %vm1219, %v1208, %v966
        %v1243 = vsel %vm1219, %v1210, %v968
        %v1245 = vsel %vm1219, %v1212, %v970
        %v1247 = vsel %vm1219, %v1214, %v972
        %v1249 = vsel %vm1219, %v1216, %v974
        %v1251 = vsel %vm1219, %v1218, %v976
        %vm1252 = vcmask 130048
        %v1254 = vsel %vm1252, %v1221, %v990
        %v1256 = vsel %vm1252, %v1223, %v992
        %v1258 = vsel %vm1252, %v1225, %v994
        %v1260 = vsel %vm1252, %v1227, %v996
        %v1262 = vsel %vm1252, %v1229, %v998
        %v1264 = vsel %vm1252, %v1231, %v1000
        %v1266 = vsel %vm1252, %v1233, %v1002
        %v1268 = vsel %vm1252, %v1235, %v1004
        %v1270 = vsel %vm1252, %v1237, %v1006
        %v1272 = vsel %vm1252, %v1239, %v1008
        %v1274 = vsel %vm1252, %v1241, %v1010
        %v1276 = vsel %vm1252, %v1243, %v1012
        %v1278 = vsel %vm1252, %v1245, %v1014
        %v1280 = vsel %vm1252, %v1247, %v1016
        %v1282 = vsel %vm1252, %v1249, %v1018
        %v1284 = vsel %vm1252, %v1251, %v1020
        %vm1285 = vcmask 162816
        %v1287 = vsel %vm1285, %v1254, %v1026
        %v1289 = vsel %vm1285, %v1256, %v1028
        %v1291 = vsel %vm1285, %v1258, %v1030
        %v1293 = vsel %vm1285, %v1260, %v1032
        %v1295 = vsel %vm1285, %v1262, %v1034
        %v1297 = vsel %vm1285, %v1264, %v1036
        %v1299 = vsel %vm1285, %v1266, %v1038
        %v1301 = vsel %vm1285, %v1268, %v1040
        %v1303 = vsel %vm1285, %v1270, %v1042
        %v1305 = vsel %vm1285, %v1272, %v1044
        %v1307 = vsel %vm1285, %v1274, %v1046
        %v1309 = vsel %vm1285, %v1276, %v1048
        %v1311 = vsel %vm1285, %v1278, %v1050
        %v1313 = vsel %vm1285, %v1280, %v1052
        %v1315 = vsel %vm1285, %v1282, %v1054
        %v1317 = vsel %vm1285, %v1284, %v1056
        %vm1318 = vcmask 195584
        %v1320 = vsel %vm1318, %v1287, %v1058
        %v1322 = vsel %vm1318, %v1289, %v1060
        %v1324 = vsel %vm1318, %v1291, %v1062
        %v1326 = vsel %vm1318, %v1293, %v1064
        %v1328 = vsel %vm1318, %v1295, %v1066
        %v1330 = vsel %vm1318, %v1297, %v1068
        %v1332 = vsel %vm1318, %v1299, %v1070
        %v1334 = vsel %vm1318, %v1301, %v1072
        %v1336 = vsel %vm1318, %v1303, %v1074
        %v1338 = vsel %vm1318, %v1305, %v1076
        %v1340 = vsel %vm1318, %v1307, %v1078
        %v1342 = vsel %vm1318, %v1309, %v1080
        %v1344 = vsel %vm1318, %v1311, %v1082
        %v1346 = vsel %vm1318, %v1313, %v1084
        %v1348 = vsel %vm1318, %v1315, %v1086
        %v1350 = vsel %vm1318, %v1317, %v1088
        %vm1351 = vcmask 228352
        %v1353 = vsel %vm1351, %v1320, %v1090
        %v1355 = vsel %vm1351, %v1322, %v1092
        %v1357 = vsel %vm1351, %v1324, %v1094
        %v1359 = vsel %vm1351, %v1326, %v1096
        %v1361 = vsel %vm1351, %v1328, %v1098
        %v1363 = vsel %vm1351, %v1330, %v1100
        %v1365 = vsel %vm1351, %v1332, %v1102
        %v1367 = vsel %vm1351, %v1334, %v1104
        %v1369 = vsel %vm1351, %v1336, %v1106
        %v1371 = vsel %vm1351, %v1338, %v1108
        %v1373 = vsel %vm1351, %v1340, %v1110
        %v1375 = vsel %vm1351, %v1342, %v1112
        %v1377 = vsel %vm1351, %v1344, %v1114
        %v1379 = vsel %vm1351, %v1346, %v1116
        %v1381 = vsel %vm1351, %v1348, %v1118
        %v1383 = vsel %vm1351, %v1350, %v1120
        %vm1384 = vcmask 261120
        %v1386 = vsel %vm1384, %v1353, %v1122
        %v1388 = vsel %vm1384, %v1355, %v1124
        %v1390 = vsel %vm1384, %v1357, %v1126
        %v1392 = vsel %vm1384, %v1359, %v1128
        %v1394 = vsel %vm1384, %v1361, %v1130
        %v1396 = vsel %vm1384, %v1363, %v1132
        %v1398 = vsel %vm1384, %v1365, %v1134
        %v1400 = vsel %vm1384, %v1367, %v1136
        %v1402 = vsel %vm1384, %v1369, %v1138
        %v1404 = vsel %vm1384, %v1371, %v1140
        %v1406 = vsel %vm1384, %v1373, %v1142
        %v1408 = vsel %vm1384, %v1375, %v1144
        %v1410 = vsel %vm1384, %v1377, %v1146
        %v1412 = vsel %vm1384, %v1379, %v1148
        %v1414 = vsel %vm1384, %v1381, %v1150
        %v1416 = vsel %vm1384, %v1383, %v1152
        %v1417 = vld [vmem:[#allocation2] sm:$0xf]
        %v1418 = vld [vmem:[#allocation2 + $0x4] sm:$0xf]
        %v1419 = vld [vmem:[#allocation2 + $0x8] sm:$0xf]
        %v1420 = vld [vmem:[#allocation2 + $0xc] sm:$0xf]
        %v1421 = vld [vmem:[#allocation2 + $0x10] sm:$0x3]
        %v1422 = vld [vmem:[#allocation4] sm:$0x1]
        %v1424 = vperm.slane %v1422, 0
        %v1431 = vunpack.c.l.b16 %v1417
        %v1432 = vunpack.c.l.b16 %v1418
        %v1433 = vunpack.c.l.b16 %v1419
        %v1434 = vunpack.c.l.b16 %v1420
        %v1435 = vunpack.c.l.b16 %v1421
        %v1436 = vpack.c.b16 %v1432, %v1431
        %v1437 = vpack.c.b16 %v1434, %v1433
        %v1438 = vpack.c.b16 %v1435, %v1435
        %vm1441 = vcmask 293888
        %v1442 = vsel %vm1441, %v1386, 0
        %v1444 = vsel %vm1441, %v1388, 0
        %v1446 = vsel %vm1441, %v1390, 0
        %v1448 = vsel %vm1441, %v1392, 0
        %v1450 = vsel %vm1441, %v1394, 0
        %v1452 = vsel %vm1441, %v1396, 0
        %v1454 = vsel %vm1441, %v1398, 0
        %v1456 = vsel %vm1441, %v1400, 0
        %v1458 = vsel %vm1441, %v1402, 0
        %v1460 = vsel %vm1441, %v1404, 0
        %v1462 = vsel %vm1441, %v1406, 0
        %v1464 = vsel %vm1441, %v1408, 0
        %v1466 = vsel %vm1441, %v1410, 0
        %v1468 = vsel %vm1441, %v1412, 0
        %v1470 = vsel %vm1441, %v1414, 0
        %v1472 = vsel %vm1441, %v1416, 0
        %vm1474 = vcmask 1041408
        %v1476 = vsel %vm1474, %v1438, 0
        %1478 = vmatpush.bf16.msra.mxu0 0
        %1479 = vmatpush.bf16.msra.mxu0 0
        %1480 = vmatpush.bf16.msra.mxu0 0
        %1481 = vmatpush.bf16.msra.mxu0 0
        %1482 = vmatpush.bf16.msra.mxu0 0
        %1483 = vmatpush.bf16.msra.mxu0 %v1476
        %1484 = vmatpush.bf16.msra.mxu0 %v1437
        %1485 = vmatpush.bf16.msra.mxu0 %v1436
        %1486 = vmatmul.bf16.gmra.mxu0 %v1442
        %v1487 = vpop.f32.mrf.mxu0
        %v1488 = vadd.f32 %v1424, %v1487
        %v1489 = vpop.f32.mrf.mxu0
        %v1490 = vadd.f32 %v1424, %v1489
        %1491 = vmatmul.bf16.gmra.mxu0 %v1444
        %v1492 = vpop.f32.mrf.mxu0
        %v1493 = vadd.f32 %v1424, %v1492
        %v1494 = vpop.f32.mrf.mxu0
        %v1495 = vadd.f32 %v1424, %v1494
        %1496 = vmatmul.bf16.gmra.mxu0 %v1446
        %v1497 = vpop.f32.mrf.mxu0
        %v1498 = vadd.f32 %v1424, %v1497
        %v1499 = vpop.f32.mrf.mxu0
        %v1500 = vadd.f32 %v1424, %v1499
        %1501 = vmatmul.bf16.gmra.mxu0 %v1448
        %v1502 = vpop.f32.mrf.mxu0
        %v1503 = vadd.f32 %v1424, %v1502
        %v1504 = vpop.f32.mrf.mxu0
        %v1505 = vadd.f32 %v1424, %v1504
        %1506 = vmatmul.bf16.gmra.mxu0 %v1450
        %v1507 = vpop.f32.mrf.mxu0
        %v1508 = vadd.f32 %v1424, %v1507
        %v1509 = vpop.f32.mrf.mxu0
        %v1510 = vadd.f32 %v1424, %v1509
        %1511 = vmatmul.bf16.gmra.mxu0 %v1452
        %v1512 = vpop.f32.mrf.mxu0
        %v1513 = vadd.f32 %v1424, %v1512
        %v1514 = vpop.f32.mrf.mxu0
        %v1515 = vadd.f32 %v1424, %v1514
        %1516 = vmatmul.bf16.gmra.mxu0 %v1454
        %v1517 = vpop.f32.mrf.mxu0
        %v1518 = vadd.f32 %v1424, %v1517
        %v1519 = vpop.f32.mrf.mxu0
        %v1520 = vadd.f32 %v1424, %v1519
        %1521 = vmatmul.bf16.gmra.mxu0 %v1456
        %v1522 = vpop.f32.mrf.mxu0
        %v1523 = vadd.f32 %v1424, %v1522
        %v1524 = vpop.f32.mrf.mxu0
        %v1525 = vadd.f32 %v1424, %v1524
        %1526 = vmatmul.bf16.gmra.mxu0 %v1458
        %v1527 = vpop.f32.mrf.mxu0
        %v1528 = vadd.f32 %v1424, %v1527
        %v1529 = vpop.f32.mrf.mxu0
        %v1530 = vadd.f32 %v1424, %v1529
        %1531 = vmatmul.bf16.gmra.mxu0 %v1460
        %v1532 = vpop.f32.mrf.mxu0
        %v1533 = vadd.f32 %v1424, %v1532
        %v1534 = vpop.f32.mrf.mxu0
        %v1535 = vadd.f32 %v1424, %v1534
        %1536 = vmatmul.bf16.gmra.mxu0 %v1462
        %v1537 = vpop.f32.mrf.mxu0
        %v1538 = vadd.f32 %v1424, %v1537
        %v1539 = vpop.f32.mrf.mxu0
        %v1540 = vadd.f32 %v1424, %v1539
        %1541 = vmatmul.bf16.gmra.mxu0 %v1464
        %v1542 = vpop.f32.mrf.mxu0
        %v1543 = vadd.f32 %v1424, %v1542
        %v1544 = vpop.f32.mrf.mxu0
        %v1545 = vadd.f32 %v1424, %v1544
        %1546 = vmatmul.bf16.gmra.mxu0 %v1466
        %v1547 = vpop.f32.mrf.mxu0
        %v1548 = vadd.f32 %v1424, %v1547
        %v1549 = vpop.f32.mrf.mxu0
        %v1550 = vadd.f32 %v1424, %v1549
        %1551 = vmatmul.bf16.gmra.mxu0 %v1468
        %v1552 = vpop.f32.mrf.mxu0
        %v1553 = vadd.f32 %v1424, %v1552
        %v1554 = vpop.f32.mrf.mxu0
        %v1555 = vadd.f32 %v1424, %v1554
        %1556 = vmatmul.bf16.gmra.mxu0 %v1470
        %v1557 = vpop.f32.mrf.mxu0
        %v1558 = vadd.f32 %v1424, %v1557
        %v1559 = vpop.f32.mrf.mxu0
        %v1560 = vadd.f32 %v1424, %v1559
        %1561 = vmatmul.bf16.gmra.mxu0 %v1472
        %v1562 = vpop.f32.mrf.mxu0
        %v1563 = vadd.f32 %v1424, %v1562
        %v1564 = vpop.f32.mrf.mxu0
        %v1565 = vadd.f32 %v1424, %v1564
        %1566 = vdwg.mxu0
        %v1567 = vpack.c.bf16 %v1488, %v1488
        %v1568 = vpack.c.bf16 %v1490, %v1490
        %v1569 = vpack.c.bf16 %v1493, %v1493
        %v1570 = vpack.c.bf16 %v1495, %v1495
        %v1571 = vpack.c.bf16 %v1498, %v1498
        %v1572 = vpack.c.bf16 %v1500, %v1500
        %v1573 = vpack.c.bf16 %v1503, %v1503
        %v1574 = vpack.c.bf16 %v1505, %v1505
        %v1575 = vpack.c.bf16 %v1508, %v1508
        %v1576 = vpack.c.bf16 %v1510, %v1510
        %v1577 = vpack.c.bf16 %v1513, %v1513
        %v1578 = vpack.c.bf16 %v1515, %v1515
        %v1579 = vpack.c.bf16 %v1518, %v1518
        %v1580 = vpack.c.bf16 %v1520, %v1520
        %v1581 = vpack.c.bf16 %v1523, %v1523
        %v1582 = vpack.c.bf16 %v1525, %v1525
        %v1583 = vpack.c.bf16 %v1528, %v1528
        %v1584 = vpack.c.bf16 %v1530, %v1530
        %v1585 = vpack.c.bf16 %v1533, %v1533
        %v1586 = vpack.c.bf16 %v1535, %v1535
        %v1587 = vpack.c.bf16 %v1538, %v1538
        %v1588 = vpack.c.bf16 %v1540, %v1540
        %v1589 = vpack.c.bf16 %v1543, %v1543
        %v1590 = vpack.c.bf16 %v1545, %v1545
        %v1591 = vpack.c.bf16 %v1548, %v1548
        %v1592 = vpack.c.bf16 %v1550, %v1550
        %v1593 = vpack.c.bf16 %v1553, %v1553
        %v1594 = vpack.c.bf16 %v1555, %v1555
        %v1595 = vpack.c.bf16 %v1558, %v1558
        %v1596 = vpack.c.bf16 %v1560, %v1560
        %v1597 = vpack.c.bf16 %v1563, %v1563
        %v1598 = vpack.c.bf16 %v1565, %v1565
        %v1631 = vunpack.c.l.b16 %v1567
        %v1632 = vunpack.c.l.b16 %v1568
        %v1633 = vunpack.c.l.b16 %v1569
        %v1634 = vunpack.c.l.b16 %v1570
        %v1635 = vunpack.c.l.b16 %v1571
        %v1636 = vunpack.c.l.b16 %v1572
        %v1637 = vunpack.c.l.b16 %v1573
        %v1638 = vunpack.c.l.b16 %v1574
        %v1639 = vunpack.c.l.b16 %v1575
        %v1640 = vunpack.c.l.b16 %v1576
        %v1641 = vunpack.c.l.b16 %v1577
        %v1642 = vunpack.c.l.b16 %v1578
        %v1643 = vunpack.c.l.b16 %v1579
        %v1644 = vunpack.c.l.b16 %v1580
        %v1645 = vunpack.c.l.b16 %v1581
        %v1646 = vunpack.c.l.b16 %v1582
        %v1647 = vunpack.c.l.b16 %v1583
        %v1648 = vunpack.c.l.b16 %v1584
        %v1649 = vunpack.c.l.b16 %v1585
        %v1650 = vunpack.c.l.b16 %v1586
        %v1651 = vunpack.c.l.b16 %v1587
        %v1652 = vunpack.c.l.b16 %v1588
        %v1653 = vunpack.c.l.b16 %v1589
        %v1654 = vunpack.c.l.b16 %v1590
        %v1655 = vunpack.c.l.b16 %v1591
        %v1656 = vunpack.c.l.b16 %v1592
        %v1657 = vunpack.c.l.b16 %v1593
        %v1658 = vunpack.c.l.b16 %v1594
        %v1659 = vunpack.c.l.b16 %v1595
        %v1660 = vunpack.c.l.b16 %v1596
        %v1661 = vunpack.c.l.b16 %v1597
        %v1662 = vunpack.c.l.b16 %v1598
        %v1663 = vpack.c.b16 %v1632, %v1631
        %v1664 = vpack.c.b16 %v1634, %v1633
        %v1665 = vpack.c.b16 %v1636, %v1635
        %v1666 = vpack.c.b16 %v1638, %v1637
        %v1667 = vpack.c.b16 %v1640, %v1639
        %v1668 = vpack.c.b16 %v1642, %v1641
        %v1669 = vpack.c.b16 %v1644, %v1643
        %v1670 = vpack.c.b16 %v1646, %v1645
        %v1671 = vpack.c.b16 %v1648, %v1647
        %v1672 = vpack.c.b16 %v1650, %v1649
        %v1673 = vpack.c.b16 %v1652, %v1651
        %v1674 = vpack.c.b16 %v1654, %v1653
        %v1675 = vpack.c.b16 %v1656, %v1655
        %v1676 = vpack.c.b16 %v1658, %v1657
        %v1677 = vpack.c.b16 %v1660, %v1659
        %v1678 = vpack.c.b16 %v1662, %v1661
        %v1680 = vshrl.u32 %v1663, 16
        %v1682 = vrot.slane %v1680, 7
        %v1683 = vshll.u32 %v1663, 16
        %v1685 = vor.u32 %v1682, %v1683
        %v1687 = vshrl.u32 %v1664, 16
        %v1689 = vrot.slane %v1687, 7
        %v1690 = vshll.u32 %v1664, 16
        %v1692 = vor.u32 %v1689, %v1690
        %v1694 = vshrl.u32 %v1665, 16
        %v1696 = vrot.slane %v1694, 7
        %v1697 = vshll.u32 %v1665, 16
        %v1699 = vor.u32 %v1696, %v1697
        %v1701 = vshrl.u32 %v1666, 16
        %v1703 = vrot.slane %v1701, 7
        %v1704 = vshll.u32 %v1666, 16
        %v1706 = vor.u32 %v1703, %v1704
        %v1708 = vshrl.u32 %v1667, 16
        %v1710 = vrot.slane %v1708, 7
        %v1711 = vshll.u32 %v1667, 16
        %v1713 = vor.u32 %v1710, %v1711
        %v1715 = vshrl.u32 %v1668, 16
        %v1717 = vrot.slane %v1715, 7
        %v1718 = vshll.u32 %v1668, 16
        %v1720 = vor.u32 %v1717, %v1718
        %v1722 = vshrl.u32 %v1669, 16
        %v1724 = vrot.slane %v1722, 7
        %v1725 = vshll.u32 %v1669, 16
        %v1727 = vor.u32 %v1724, %v1725
        %v1729 = vshrl.u32 %v1670, 16
        %v1731 = vrot.slane %v1729, 7
        %v1732 = vshll.u32 %v1670, 16
        %v1734 = vor.u32 %v1731, %v1732
        %v1736 = vshrl.u32 %v1671, 16
        %v1738 = vrot.slane %v1736, 7
        %v1739 = vshll.u32 %v1671, 16
        %v1741 = vor.u32 %v1738, %v1739
        %v1743 = vshrl.u32 %v1672, 16
        %v1745 = vrot.slane %v1743, 7
        %v1746 = vshll.u32 %v1672, 16
        %v1748 = vor.u32 %v1745, %v1746
        %v1750 = vshrl.u32 %v1673, 16
        %v1752 = vrot.slane %v1750, 7
        %v1753 = vshll.u32 %v1673, 16
        %v1755 = vor.u32 %v1752, %v1753
        %v1757 = vshrl.u32 %v1674, 16
        %v1759 = vrot.slane %v1757, 7
        %v1760 = vshll.u32 %v1674, 16
        %v1762 = vor.u32 %v1759, %v1760
        %v1764 = vshrl.u32 %v1675, 16
        %v1766 = vrot.slane %v1764, 7
        %v1767 = vshll.u32 %v1675, 16
        %v1769 = vor.u32 %v1766, %v1767
        %v1771 = vshrl.u32 %v1676, 16
        %v1773 = vrot.slane %v1771, 7
        %v1774 = vshll.u32 %v1676, 16
        %v1776 = vor.u32 %v1773, %v1774
        %v1778 = vshrl.u32 %v1677, 16
        %v1780 = vrot.slane %v1778, 7
        %v1781 = vshll.u32 %v1677, 16
        %v1783 = vor.u32 %v1780, %v1781
        %v1785 = vshrl.u32 %v1678, 16
        %v1787 = vrot.slane %v1785, 7
        %v1788 = vshll.u32 %v1678, 16
        %v1790 = vor.u32 %v1787, %v1788
        %v1823 = vsel %vm571, 0, %v1685
        %v1824 = vsel %vm571, 0, %v1692
        %v1825 = vsel %vm571, 0, %v1699
        %v1826 = vsel %vm571, 0, %v1706
        %v1827 = vsel %vm571, 0, %v1713
        %v1828 = vsel %vm571, 0, %v1720
        %v1829 = vsel %vm571, 0, %v1727
        %v1830 = vsel %vm571, 0, %v1734
        %v1831 = vsel %vm571, 0, %v1741
        %v1832 = vsel %vm571, 0, %v1748
        %v1833 = vsel %vm571, 0, %v1755
        %v1834 = vsel %vm571, 0, %v1762
        %v1835 = vsel %vm571, 0, %v1769
        %v1836 = vsel %vm571, 0, %v1776
        %v1837 = vsel %vm571, 0, %v1783
        %v1838 = vsel %vm571, 0, %v1790
        %v1839 = vsel %vm571, %v1682, 0
        %v1840 = vsel %vm571, %v1689, 0
        %v1841 = vsel %vm571, %v1696, 0
        %v1842 = vsel %vm571, %v1703, 0
        %v1843 = vsel %vm571, %v1710, 0
        %v1844 = vsel %vm571, %v1717, 0
        %v1845 = vsel %vm571, %v1724, 0
        %v1846 = vsel %vm571, %v1731, 0
        %v1847 = vsel %vm571, %v1738, 0
        %v1848 = vsel %vm571, %v1745, 0
        %v1849 = vsel %vm571, %v1752, 0
        %v1850 = vsel %vm571, %v1759, 0
        %v1851 = vsel %vm571, %v1766, 0
        %v1852 = vsel %vm571, %v1773, 0
        %v1853 = vsel %vm571, %v1780, 0
        %v1854 = vsel %vm571, %v1787, 0
        %v1856 = vshrl.u32 %v1823, 16
        %v1858 = vshll.u32 %v1823, 16
        %v1860 = vrot.slane %v1858, 1
        %v1861 = vor.u32 %v1856, %v1860
        %v1863 = vshll.u32 %v1839, 16
        %v1865 = vrot.slane %v1863, 1
        %v1866 = vsel %vm606, %v1861, %v1865
        %v1868 = vshrl.u32 %v1824, 16
        %v1870 = vshll.u32 %v1824, 16
        %v1872 = vrot.slane %v1870, 1
        %v1873 = vor.u32 %v1868, %v1872
        %v1875 = vshll.u32 %v1840, 16
        %v1877 = vrot.slane %v1875, 1
        %v1878 = vsel %vm606, %v1873, %v1877
        %v1880 = vshrl.u32 %v1825, 16
        %v1882 = vshll.u32 %v1825, 16
        %v1884 = vrot.slane %v1882, 1
        %v1885 = vor.u32 %v1880, %v1884
        %v1887 = vshll.u32 %v1841, 16
        %v1889 = vrot.slane %v1887, 1
        %v1890 = vsel %vm606, %v1885, %v1889
        %v1892 = vshrl.u32 %v1826, 16
        %v1894 = vshll.u32 %v1826, 16
        %v1896 = vrot.slane %v1894, 1
        %v1897 = vor.u32 %v1892, %v1896
        %v1899 = vshll.u32 %v1842, 16
        %v1901 = vrot.slane %v1899, 1
        %v1902 = vsel %vm606, %v1897, %v1901
        %v1904 = vshrl.u32 %v1827, 16
        %v1906 = vshll.u32 %v1827, 16
        %v1908 = vrot.slane %v1906, 1
        %v1909 = vor.u32 %v1904, %v1908
        %v1911 = vshll.u32 %v1843, 16
        %v1913 = vrot.slane %v1911, 1
        %v1914 = vsel %vm606, %v1909, %v1913
        %v1916 = vshrl.u32 %v1828, 16
        %v1918 = vshll.u32 %v1828, 16
        %v1920 = vrot.slane %v1918, 1
        %v1921 = vor.u32 %v1916, %v1920
        %v1923 = vshll.u32 %v1844, 16
        %v1925 = vrot.slane %v1923, 1
        %v1926 = vsel %vm606, %v1921, %v1925
        %v1928 = vshrl.u32 %v1829, 16
        %v1930 = vshll.u32 %v1829, 16
        %v1932 = vrot.slane %v1930, 1
        %v1933 = vor.u32 %v1928, %v1932
        %v1935 = vshll.u32 %v1845, 16
        %v1937 = vrot.slane %v1935, 1
        %v1938 = vsel %vm606, %v1933, %v1937
        %v1940 = vshrl.u32 %v1830, 16
        %v1942 = vshll.u32 %v1830, 16
        %v1944 = vrot.slane %v1942, 1
        %v1945 = vor.u32 %v1940, %v1944
        %v1947 = vshll.u32 %v1846, 16
        %v1949 = vrot.slane %v1947, 1
        %v1950 = vsel %vm606, %v1945, %v1949
        %v1952 = vshrl.u32 %v1831, 16
        %v1954 = vshll.u32 %v1831, 16
        %v1956 = vrot.slane %v1954, 1
        %v1957 = vor.u32 %v1952, %v1956
        %v1959 = vshll.u32 %v1847, 16
        %v1961 = vrot.slane %v1959, 1
        %v1962 = vsel %vm606, %v1957, %v1961
        %v1964 = vshrl.u32 %v1832, 16
        %v1966 = vshll.u32 %v1832, 16
        %v1968 = vrot.slane %v1966, 1
        %v1969 = vor.u32 %v1964, %v1968
        %v1971 = vshll.u32 %v1848, 16
        %v1973 = vrot.slane %v1971, 1
        %v1974 = vsel %vm606, %v1969, %v1973
        %v1976 = vshrl.u32 %v1833, 16
        %v1978 = vshll.u32 %v1833, 16
        %v1980 = vrot.slane %v1978, 1
        %v1981 = vor.u32 %v1976, %v1980
        %v1983 = vshll.u32 %v1849, 16
        %v1985 = vrot.slane %v1983, 1
        %v1986 = vsel %vm606, %v1981, %v1985
        %v1988 = vshrl.u32 %v1834, 16
        %v1990 = vshll.u32 %v1834, 16
        %v1992 = vrot.slane %v1990, 1
        %v1993 = vor.u32 %v1988, %v1992
        %v1995 = vshll.u32 %v1850, 16
        %v1997 = vrot.slane %v1995, 1
        %v1998 = vsel %vm606, %v1993, %v1997
        %v2000 = vshrl.u32 %v1835, 16
        %v2002 = vshll.u32 %v1835, 16
        %v2004 = vrot.slane %v2002, 1
        %v2005 = vor.u32 %v2000, %v2004
        %v2007 = vshll.u32 %v1851, 16
        %v2009 = vrot.slane %v2007, 1
        %v2010 = vsel %vm606, %v2005, %v2009
        %v2012 = vshrl.u32 %v1836, 16
        %v2014 = vshll.u32 %v1836, 16
        %v2016 = vrot.slane %v2014, 1
        %v2017 = vor.u32 %v2012, %v2016
        %v2019 = vshll.u32 %v1852, 16
        %v2021 = vrot.slane %v2019, 1
        %v2022 = vsel %vm606, %v2017, %v2021
        %v2024 = vshrl.u32 %v1837, 16
        %v2026 = vshll.u32 %v1837, 16
        %v2028 = vrot.slane %v2026, 1
        %v2029 = vor.u32 %v2024, %v2028
        %v2031 = vshll.u32 %v1853, 16
        %v2033 = vrot.slane %v2031, 1
        %v2034 = vsel %vm606, %v2029, %v2033
        %v2081 = vrot.slane %v1823, 1
        %v2082 = vrot.slane %v1839, 1
        %v2083 = vsel %vm863, %v2081, %v2082
        %v2084 = vrot.slane %v1824, 1
        %v2085 = vrot.slane %v1840, 1
        %v2086 = vsel %vm863, %v2084, %v2085
        %v2087 = vrot.slane %v1825, 1
        %v2088 = vrot.slane %v1841, 1
        %v2089 = vsel %vm863, %v2087, %v2088
        %v2090 = vrot.slane %v1826, 1
        %v2091 = vrot.slane %v1842, 1
        %v2092 = vsel %vm863, %v2090, %v2091
        %v2093 = vrot.slane %v1827, 1
        %v2094 = vrot.slane %v1843, 1
        %v2095 = vsel %vm863, %v2093, %v2094
        %v2096 = vrot.slane %v1828, 1
        %v2097 = vrot.slane %v1844, 1
        %v2098 = vsel %vm863, %v2096, %v2097
        %v2099 = vrot.slane %v1829, 1
        %v2100 = vrot.slane %v1845, 1
        %v2101 = vsel %vm863, %v2099, %v2100
        %v2102 = vrot.slane %v1830, 1
        %v2103 = vrot.slane %v1846, 1
        %v2104 = vsel %vm863, %v2102, %v2103
        %v2105 = vrot.slane %v1831, 1
        %v2106 = vrot.slane %v1847, 1
        %v2107 = vsel %vm863, %v2105, %v2106
        %v2108 = vrot.slane %v1832, 1
        %v2109 = vrot.slane %v1848, 1
        %v2110 = vsel %vm863, %v2108, %v2109
        %v2111 = vrot.slane %v1833, 1
        %v2112 = vrot.slane %v1849, 1
        %v2113 = vsel %vm863, %v2111, %v2112
        %v2114 = vrot.slane %v1834, 1
        %v2115 = vrot.slane %v1850, 1
        %v2116 = vsel %vm863, %v2114, %v2115
        %v2117 = vrot.slane %v1835, 1
        %v2118 = vrot.slane %v1851, 1
        %v2119 = vsel %vm863, %v2117, %v2118
        %v2120 = vrot.slane %v1836, 1
        %v2121 = vrot.slane %v1852, 1
        %v2122 = vsel %vm863, %v2120, %v2121
        %v2123 = vrot.slane %v1837, 1
        %v2124 = vrot.slane %v1853, 1
        %v2125 = vsel %vm863, %v2123, %v2124
        %v2143 = vshrl.u32 %v1838, 16
        %v2145 = vshll.u32 %v1838, 16
        %v2147 = vrot.slane %v2145, 1
        %v2148 = vor.u32 %v2143, %v2147
        %v2150 = vshll.u32 %v1854, 16
        %v2152 = vrot.slane %v2150, 1
        %v2153 = vsel %vm606, %v2148, %v2152
        %v2157 = vrot.slane %v1838, 1
        %v2158 = vrot.slane %v1854, 1
        %v2159 = vsel %vm863, %v2157, %v2158
        %v2161 = vld [vmem:[%s3] sm:$0xf]
        %v2162 = vld [vmem:[%s3 + $0x4] sm:$0xf]
        %v2163 = vld [vmem:[%s3 + $0x8] sm:$0xf]
        %v2164 = vld [vmem:[%s3 + $0xc] sm:$0xf]
        %v2165 = vld [vmem:[%s3 + $0x10] sm:$0xf]
        %v2166 = vld [vmem:[%s3 + $0x14] sm:$0xf]
        %v2167 = vld [vmem:[%s3 + $0x18] sm:$0xf]
        %v2168 = vld [vmem:[%s3 + $0x1c] sm:$0xf]
        %v2169 = vld [vmem:[%s3 + $0x20] sm:$0xf]
        %v2170 = vld [vmem:[%s3 + $0x24] sm:$0xf]
        %v2171 = vld [vmem:[%s3 + $0x28] sm:$0xf]
        %v2172 = vld [vmem:[%s3 + $0x2c] sm:$0xf]
        %v2173 = vld [vmem:[%s3 + $0x30] sm:$0xf]
        %v2174 = vld [vmem:[%s3 + $0x34] sm:$0xf]
        %v2175 = vld [vmem:[%s3 + $0x38] sm:$0xf]
        %v2176 = vld [vmem:[%s3 + $0x3c] sm:$0xf]
        %v2177 = vld [vmem:[%s3 + $0x40] sm:$0xf]
        %v2178 = vld [vmem:[%s3 + $0x44] sm:$0xf]
        %v2179 = vld [vmem:[%s3 + $0x48] sm:$0xf]
        %v2180 = vld [vmem:[%s3 + $0x4c] sm:$0xf]
        %v2181 = vld [vmem:[%s3 + $0x50] sm:$0xf]
        %v2182 = vld [vmem:[%s3 + $0x54] sm:$0xf]
        %v2183 = vld [vmem:[%s3 + $0x58] sm:$0xf]
        %v2184 = vld [vmem:[%s3 + $0x5c] sm:$0xf]
        %v2185 = vld [vmem:[%s3 + $0x60] sm:$0xf]
        %v2186 = vld [vmem:[%s3 + $0x64] sm:$0xf]
        %v2187 = vld [vmem:[%s3 + $0x68] sm:$0xf]
        %v2188 = vld [vmem:[%s3 + $0x6c] sm:$0xf]
        %v2189 = vld [vmem:[%s3 + $0x70] sm:$0xf]
        %v2190 = vld [vmem:[%s3 + $0x74] sm:$0xf]
        %v2191 = vld [vmem:[%s3 + $0x78] sm:$0xf]
        %v2192 = vld [vmem:[%s3 + $0x7c] sm:$0xf]
        %v2193 = vld [vmem:[%s3 + $0x80] sm:$0xf]
        %v2194 = vld [vmem:[%s3 + $0x84] sm:$0xf]
        %v2195 = vld [vmem:[%s3 + $0x88] sm:$0xf]
        %v2196 = vld [vmem:[%s3 + $0x8c] sm:$0xf]
        %v2197 = vld [vmem:[%s3 + $0x90] sm:$0xf]
        %v2198 = vld [vmem:[%s3 + $0x94] sm:$0xf]
        %v2199 = vld [vmem:[%s3 + $0x98] sm:$0xf]
        %v2200 = vld [vmem:[%s3 + $0x9c] sm:$0xf]
        %v2201 = vld [vmem:[%s3 + $0xa0] sm:$0xf]
        %v2202 = vld [vmem:[%s3 + $0xa4] sm:$0xf]
        %v2203 = vld [vmem:[%s3 + $0xa8] sm:$0xf]
        %v2204 = vld [vmem:[%s3 + $0xac] sm:$0xf]
        %v2205 = vld [vmem:[%s3 + $0xb0] sm:$0xf]
        %v2206 = vld [vmem:[%s3 + $0xb4] sm:$0xf]
        %v2207 = vld [vmem:[%s3 + $0xb8] sm:$0xf]
        %v2208 = vld [vmem:[%s3 + $0xbc] sm:$0xf]
        %v2209 = vld [vmem:[%s3 + $0xc0] sm:$0xf]
        %v2210 = vld [vmem:[%s3 + $0xc4] sm:$0xf]
        %v2211 = vld [vmem:[%s3 + $0xc8] sm:$0xf]
        %v2212 = vld [vmem:[%s3 + $0xcc] sm:$0xf]
        %v2213 = vld [vmem:[%s3 + $0xd0] sm:$0xf]
        %v2214 = vld [vmem:[%s3 + $0xd4] sm:$0xf]
        %v2215 = vld [vmem:[%s3 + $0xd8] sm:$0xf]
        %v2216 = vld [vmem:[%s3 + $0xdc] sm:$0xf]
        %v2217 = vld [vmem:[%s3 + $0xe0] sm:$0xf]
        %v2218 = vld [vmem:[%s3 + $0xe4] sm:$0xf]
        %v2219 = vld [vmem:[%s3 + $0xe8] sm:$0xf]
        %v2220 = vld [vmem:[%s3 + $0xec] sm:$0xf]
        %v2221 = vld [vmem:[%s3 + $0xf0] sm:$0xf]
        %v2222 = vld [vmem:[%s3 + $0xf4] sm:$0xf]
        %v2223 = vld [vmem:[%s3 + $0xf8] sm:$0xf]
        %v2224 = vld [vmem:[%s3 + $0xfc] sm:$0xf]
        %v2225 = vld [vmem:[%s3 + $0x100] sm:$0xf]
        %v2226 = vld [vmem:[%s3 + $0x104] sm:$0xf]
        %v2227 = vld [vmem:[%s3 + $0x108] sm:$0xf]
        %v2228 = vld [vmem:[%s3 + $0x10c] sm:$0xf]
        %v2229 = vld [vmem:[%s3 + $0x110] sm:$0xf]
        %v2230 = vld [vmem:[%s3 + $0x114] sm:$0xf]
        %v2231 = vld [vmem:[%s3 + $0x118] sm:$0xf]
        %v2232 = vld [vmem:[%s3 + $0x11c] sm:$0xf]
        %v2233 = vld [vmem:[%s3 + $0x120] sm:$0xf]
        %v2234 = vld [vmem:[%s3 + $0x124] sm:$0xf]
        %v2235 = vld [vmem:[%s3 + $0x128] sm:$0xf]
        %v2236 = vld [vmem:[%s3 + $0x12c] sm:$0xf]
        %v2237 = vld [vmem:[%s3 + $0x130] sm:$0xf]
        %v2238 = vld [vmem:[%s3 + $0x134] sm:$0xf]
        %v2239 = vld [vmem:[%s3 + $0x138] sm:$0xf]
        %v2240 = vld [vmem:[%s3 + $0x13c] sm:$0xf]
        %v2241 = vld [vmem:[%s3 + $0x140] sm:$0xf]
        %v2242 = vld [vmem:[%s3 + $0x144] sm:$0xf]
        %v2243 = vld [vmem:[%s3 + $0x148] sm:$0xf]
        %v2244 = vld [vmem:[%s3 + $0x14c] sm:$0xf]
        %v2245 = vld [vmem:[%s3 + $0x150] sm:$0xf]
        %v2246 = vld [vmem:[%s3 + $0x154] sm:$0xf]
        %v2247 = vld [vmem:[%s3 + $0x158] sm:$0xf]
        %v2248 = vld [vmem:[%s3 + $0x15c] sm:$0xf]
        %v2249 = vld [vmem:[%s3 + $0x160] sm:$0xf]
        %v2250 = vld [vmem:[%s3 + $0x164] sm:$0xf]
        %v2251 = vld [vmem:[%s3 + $0x168] sm:$0xf]
        %v2252 = vld [vmem:[%s3 + $0x16c] sm:$0xf]
        %v2253 = vld [vmem:[%s3 + $0x170] sm:$0xf]
        %v2254 = vld [vmem:[%s3 + $0x174] sm:$0xf]
        %v2255 = vld [vmem:[%s3 + $0x178] sm:$0xf]
        %v2256 = vld [vmem:[%s3 + $0x17c] sm:$0xf]
        %v2257 = vld [vmem:[%s3 + $0x180] sm:$0xf]
        %v2258 = vld [vmem:[%s3 + $0x184] sm:$0xf]
        %v2259 = vld [vmem:[%s3 + $0x188] sm:$0xf]
        %v2260 = vld [vmem:[%s3 + $0x18c] sm:$0xf]
        %v2261 = vld [vmem:[%s3 + $0x190] sm:$0xf]
        %v2262 = vld [vmem:[%s3 + $0x194] sm:$0xf]
        %v2263 = vld [vmem:[%s3 + $0x198] sm:$0xf]
        %v2264 = vld [vmem:[%s3 + $0x19c] sm:$0xf]
        %v2265 = vld [vmem:[%s3 + $0x1a0] sm:$0xf]
        %v2266 = vld [vmem:[%s3 + $0x1a4] sm:$0xf]
        %v2267 = vld [vmem:[%s3 + $0x1a8] sm:$0xf]
        %v2268 = vld [vmem:[%s3 + $0x1ac] sm:$0xf]
        %v2269 = vld [vmem:[%s3 + $0x1b0] sm:$0xf]
        %v2270 = vld [vmem:[%s3 + $0x1b4] sm:$0xf]
        %v2271 = vld [vmem:[%s3 + $0x1b8] sm:$0xf]
        %v2272 = vld [vmem:[%s3 + $0x1bc] sm:$0xf]
        %v2273 = vld [vmem:[%s3 + $0x1c0] sm:$0xf]
        %v2274 = vld [vmem:[%s3 + $0x1c4] sm:$0xf]
        %v2275 = vld [vmem:[%s3 + $0x1c8] sm:$0xf]
        %v2276 = vld [vmem:[%s3 + $0x1cc] sm:$0xf]
        %v2277 = vld [vmem:[%s3 + $0x1d0] sm:$0xf]
        %v2278 = vld [vmem:[%s3 + $0x1d4] sm:$0xf]
        %v2279 = vld [vmem:[%s3 + $0x1d8] sm:$0xf]
        %v2280 = vld [vmem:[%s3 + $0x1dc] sm:$0xf]
        %v2281 = vld [vmem:[%s3 + $0x1e0] sm:$0xf]
        %v2282 = vld [vmem:[%s3 + $0x1e4] sm:$0xf]
        %v2283 = vld [vmem:[%s3 + $0x1e8] sm:$0xf]
        %v2284 = vld [vmem:[%s3 + $0x1ec] sm:$0xf]
        %v2285 = vld [vmem:[%s3 + $0x1f0] sm:$0xf]
        %v2286 = vld [vmem:[%s3 + $0x1f4] sm:$0xf]
        %v2287 = vld [vmem:[%s3 + $0x1f8] sm:$0xf]
        %v2288 = vld [vmem:[%s3 + $0x1fc] sm:$0xf]
        %v2289 = vld [vmem:[%s3 + $0x200] sm:$0xf]
        %v2290 = vld [vmem:[%s3 + $0x204] sm:$0xf]
        %v2291 = vld [vmem:[%s3 + $0x208] sm:$0xf]
        %v2292 = vld [vmem:[%s3 + $0x20c] sm:$0xf]
        %v2293 = vld [vmem:[%s3 + $0x210] sm:$0xf]
        %v2294 = vld [vmem:[%s3 + $0x214] sm:$0xf]
        %v2295 = vld [vmem:[%s3 + $0x218] sm:$0xf]
        %v2296 = vld [vmem:[%s3 + $0x21c] sm:$0xf]
        %v2297 = vld [vmem:[%s3 + $0x220] sm:$0xf]
        %v2298 = vld [vmem:[%s3 + $0x224] sm:$0xf]
        %v2299 = vld [vmem:[%s3 + $0x228] sm:$0xf]
        %v2300 = vld [vmem:[%s3 + $0x22c] sm:$0xf]
        %v2301 = vld [vmem:[%s3 + $0x230] sm:$0xf]
        %v2302 = vld [vmem:[%s3 + $0x234] sm:$0xf]
        %v2303 = vld [vmem:[%s3 + $0x238] sm:$0xf]
        %v2304 = vld [vmem:[%s3 + $0x23c] sm:$0xf]
        %v2305 = vld [vmem:[#allocation6] sm:$0x1]
        %v2307 = vperm.slane %v2305, 0
        %v2453 = vunpack.c.l.b16 %v2161
        %v2454 = vunpack.c.l.b16 %v2162
        %v2455 = vunpack.c.l.b16 %v2163
        %v2456 = vunpack.c.l.b16 %v2164
        %v2457 = vunpack.c.l.b16 %v2165
        %v2458 = vunpack.c.l.b16 %v2166
        %v2459 = vunpack.c.l.b16 %v2167
        %v2460 = vunpack.c.l.b16 %v2168
        %v2461 = vunpack.c.l.b16 %v2169
        %v2462 = vunpack.c.l.b16 %v2170
        %v2463 = vunpack.c.l.b16 %v2171
        %v2464 = vunpack.c.l.b16 %v2172
        %v2465 = vunpack.c.l.b16 %v2173
        %v2466 = vunpack.c.l.b16 %v2174
        %v2467 = vunpack.c.l.b16 %v2175
        %v2468 = vunpack.c.l.b16 %v2176
        %v2469 = vunpack.c.l.b16 %v2177
        %v2470 = vunpack.c.l.b16 %v2178
        %v2471 = vunpack.c.l.b16 %v2179
        %v2472 = vunpack.c.l.b16 %v2180
        %v2473 = vunpack.c.l.b16 %v2181
        %v2474 = vunpack.c.l.b16 %v2182
        %v2475 = vunpack.c.l.b16 %v2183
        %v2476 = vunpack.c.l.b16 %v2184
        %v2477 = vunpack.c.l.b16 %v2185
        %v2478 = vunpack.c.l.b16 %v2186
        %v2479 = vunpack.c.l.b16 %v2187
        %v2480 = vunpack.c.l.b16 %v2188
        %v2481 = vunpack.c.l.b16 %v2189
        %v2482 = vunpack.c.l.b16 %v2190
        %v2483 = vunpack.c.l.b16 %v2191
        %v2484 = vunpack.c.l.b16 %v2192
        %v2485 = vunpack.c.l.b16 %v2193
        %v2486 = vunpack.c.l.b16 %v2194
        %v2487 = vunpack.c.l.b16 %v2195
        %v2488 = vunpack.c.l.b16 %v2196
        %v2489 = vunpack.c.l.b16 %v2197
        %v2490 = vunpack.c.l.b16 %v2198
        %v2491 = vunpack.c.l.b16 %v2199
        %v2492 = vunpack.c.l.b16 %v2200
        %v2493 = vunpack.c.l.b16 %v2201
        %v2494 = vunpack.c.l.b16 %v2202
        %v2495 = vunpack.c.l.b16 %v2203
        %v2496 = vunpack.c.l.b16 %v2204
        %v2497 = vunpack.c.l.b16 %v2205
        %v2498 = vunpack.c.l.b16 %v2206
        %v2499 = vunpack.c.l.b16 %v2207
        %v2500 = vunpack.c.l.b16 %v2208
        %v2501 = vunpack.c.l.b16 %v2209
        %v2502 = vunpack.c.l.b16 %v2210
        %v2503 = vunpack.c.l.b16 %v2211
        %v2504 = vunpack.c.l.b16 %v2212
        %v2505 = vunpack.c.l.b16 %v2213
        %v2506 = vunpack.c.l.b16 %v2214
        %v2507 = vunpack.c.l.b16 %v2215
        %v2508 = vunpack.c.l.b16 %v2216
        %v2509 = vunpack.c.l.b16 %v2217
        %v2510 = vunpack.c.l.b16 %v2218
        %v2511 = vunpack.c.l.b16 %v2219
        %v2512 = vunpack.c.l.b16 %v2220
        %v2513 = vunpack.c.l.b16 %v2221
        %v2514 = vunpack.c.l.b16 %v2222
        %v2515 = vunpack.c.l.b16 %v2223
        %v2516 = vunpack.c.l.b16 %v2224
        %v2517 = vunpack.c.l.b16 %v2225
        %v2518 = vunpack.c.l.b16 %v2226
        %v2519 = vunpack.c.l.b16 %v2227
        %v2520 = vunpack.c.l.b16 %v2228
        %v2521 = vunpack.c.l.b16 %v2229
        %v2522 = vunpack.c.l.b16 %v2230
        %v2523 = vunpack.c.l.b16 %v2231
        %v2524 = vunpack.c.l.b16 %v2232
        %v2525 = vunpack.c.l.b16 %v2233
        %v2526 = vunpack.c.l.b16 %v2234
        %v2527 = vunpack.c.l.b16 %v2235
        %v2528 = vunpack.c.l.b16 %v2236
        %v2529 = vunpack.c.l.b16 %v2237
        %v2530 = vunpack.c.l.b16 %v2238
        %v2531 = vunpack.c.l.b16 %v2239
        %v2532 = vunpack.c.l.b16 %v2240
        %v2533 = vunpack.c.l.b16 %v2241
        %v2534 = vunpack.c.l.b16 %v2242
        %v2535 = vunpack.c.l.b16 %v2243
        %v2536 = vunpack.c.l.b16 %v2244
        %v2537 = vunpack.c.l.b16 %v2245
        %v2538 = vunpack.c.l.b16 %v2246
        %v2539 = vunpack.c.l.b16 %v2247
        %v2540 = vunpack.c.l.b16 %v2248
        %v2541 = vunpack.c.l.b16 %v2249
        %v2542 = vunpack.c.l.b16 %v2250
        %v2543 = vunpack.c.l.b16 %v2251
        %v2544 = vunpack.c.l.b16 %v2252
        %v2545 = vunpack.c.l.b16 %v2253
        %v2546 = vunpack.c.l.b16 %v2254
        %v2547 = vunpack.c.l.b16 %v2255
        %v2548 = vunpack.c.l.b16 %v2256
        %v2549 = vunpack.c.l.b16 %v2257
        %v2550 = vunpack.c.l.b16 %v2258
        %v2551 = vunpack.c.l.b16 %v2259
        %v2552 = vunpack.c.l.b16 %v2260
        %v2553 = vunpack.c.l.b16 %v2261
        %v2554 = vunpack.c.l.b16 %v2262
        %v2555 = vunpack.c.l.b16 %v2263
        %v2556 = vunpack.c.l.b16 %v2264
        %v2557 = vunpack.c.l.b16 %v2265
        %v2558 = vunpack.c.l.b16 %v2266
        %v2559 = vunpack.c.l.b16 %v2267
        %v2560 = vunpack.c.l.b16 %v2268
        %v2561 = vunpack.c.l.b16 %v2269
        %v2562 = vunpack.c.l.b16 %v2270
        %v2563 = vunpack.c.l.b16 %v2271
        %v2564 = vunpack.c.l.b16 %v2272
        %v2565 = vunpack.c.l.b16 %v2273
        %v2566 = vunpack.c.l.b16 %v2274
        %v2567 = vunpack.c.l.b16 %v2275
        %v2568 = vunpack.c.l.b16 %v2276
        %v2569 = vunpack.c.l.b16 %v2277
        %v2570 = vunpack.c.l.b16 %v2278
        %v2571 = vunpack.c.l.b16 %v2279
        %v2572 = vunpack.c.l.b16 %v2280
        %v2573 = vunpack.c.l.b16 %v2281
        %v2574 = vunpack.c.l.b16 %v2282
        %v2575 = vunpack.c.l.b16 %v2283
        %v2576 = vunpack.c.l.b16 %v2284
        %v2577 = vunpack.c.l.b16 %v2285
        %v2578 = vunpack.c.l.b16 %v2286
        %v2579 = vunpack.c.l.b16 %v2287
        %v2580 = vunpack.c.l.b16 %v2288
        %v2581 = vunpack.c.l.b16 %v2289
        %v2582 = vunpack.c.l.b16 %v2290
        %v2583 = vunpack.c.l.b16 %v2291
        %v2584 = vunpack.c.l.b16 %v2292
        %v2585 = vunpack.c.l.b16 %v2293
        %v2586 = vunpack.c.l.b16 %v2294
        %v2587 = vunpack.c.l.b16 %v2295
        %v2588 = vunpack.c.l.b16 %v2296
        %v2589 = vunpack.c.l.b16 %v2297
        %v2590 = vunpack.c.l.b16 %v2298
        %v2591 = vunpack.c.l.b16 %v2299
        %v2592 = vunpack.c.l.b16 %v2300
        %v2593 = vunpack.c.l.b16 %v2301
        %v2594 = vunpack.c.l.b16 %v2302
        %v2595 = vunpack.c.l.b16 %v2303
        %v2596 = vunpack.c.l.b16 %v2304
        %v2597 = vpack.c.b16 %v2454, %v2453
        %v2598 = vpack.c.b16 %v2456, %v2455
        %v2599 = vpack.c.b16 %v2458, %v2457
        %v2600 = vpack.c.b16 %v2460, %v2459
        %v2601 = vpack.c.b16 %v2462, %v2461
        %v2602 = vpack.c.b16 %v2464, %v2463
        %v2603 = vpack.c.b16 %v2466, %v2465
        %v2604 = vpack.c.b16 %v2468, %v2467
        %v2605 = vpack.c.b16 %v2470, %v2469
        %v2606 = vpack.c.b16 %v2472, %v2471
        %v2607 = vpack.c.b16 %v2474, %v2473
        %v2608 = vpack.c.b16 %v2476, %v2475
        %v2609 = vpack.c.b16 %v2478, %v2477
        %v2610 = vpack.c.b16 %v2480, %v2479
        %v2611 = vpack.c.b16 %v2482, %v2481
        %v2612 = vpack.c.b16 %v2484, %v2483
        %v2613 = vpack.c.b16 %v2486, %v2485
        %v2614 = vpack.c.b16 %v2488, %v2487
        %v2615 = vpack.c.b16 %v2490, %v2489
        %v2616 = vpack.c.b16 %v2492, %v2491
        %v2617 = vpack.c.b16 %v2494, %v2493
        %v2618 = vpack.c.b16 %v2496, %v2495
        %v2619 = vpack.c.b16 %v2498, %v2497
        %v2620 = vpack.c.b16 %v2500, %v2499
        %v2621 = vpack.c.b16 %v2502, %v2501
        %v2622 = vpack.c.b16 %v2504, %v2503
        %v2623 = vpack.c.b16 %v2506, %v2505
        %v2624 = vpack.c.b16 %v2508, %v2507
        %v2625 = vpack.c.b16 %v2510, %v2509
        %v2626 = vpack.c.b16 %v2512, %v2511
        %v2627 = vpack.c.b16 %v2514, %v2513
        %v2628 = vpack.c.b16 %v2516, %v2515
        %v2629 = vpack.c.b16 %v2518, %v2517
        %v2630 = vpack.c.b16 %v2520, %v2519
        %v2631 = vpack.c.b16 %v2522, %v2521
        %v2632 = vpack.c.b16 %v2524, %v2523
        %v2633 = vpack.c.b16 %v2526, %v2525
        %v2634 = vpack.c.b16 %v2528, %v2527
        %v2635 = vpack.c.b16 %v2530, %v2529
        %v2636 = vpack.c.b16 %v2532, %v2531
        %v2637 = vpack.c.b16 %v2534, %v2533
        %v2638 = vpack.c.b16 %v2536, %v2535
        %v2639 = vpack.c.b16 %v2538, %v2537
        %v2640 = vpack.c.b16 %v2540, %v2539
        %v2641 = vpack.c.b16 %v2542, %v2541
        %v2642 = vpack.c.b16 %v2544, %v2543
        %v2643 = vpack.c.b16 %v2546, %v2545
        %v2644 = vpack.c.b16 %v2548, %v2547
        %v2645 = vpack.c.b16 %v2550, %v2549
        %v2646 = vpack.c.b16 %v2552, %v2551
        %v2647 = vpack.c.b16 %v2554, %v2553
        %v2648 = vpack.c.b16 %v2556, %v2555
        %v2649 = vpack.c.b16 %v2558, %v2557
        %v2650 = vpack.c.b16 %v2560, %v2559
        %v2651 = vpack.c.b16 %v2562, %v2561
        %v2652 = vpack.c.b16 %v2564, %v2563
        %v2653 = vpack.c.b16 %v2566, %v2565
        %v2654 = vpack.c.b16 %v2568, %v2567
        %v2655 = vpack.c.b16 %v2570, %v2569
        %v2656 = vpack.c.b16 %v2572, %v2571
        %v2657 = vpack.c.b16 %v2574, %v2573
        %v2658 = vpack.c.b16 %v2576, %v2575
        %v2659 = vpack.c.b16 %v2578, %v2577
        %v2660 = vpack.c.b16 %v2580, %v2579
        %v2661 = vpack.c.b16 %v2582, %v2581
        %v2662 = vpack.c.b16 %v2584, %v2583
        %v2663 = vpack.c.b16 %v2586, %v2585
        %v2664 = vpack.c.b16 %v2588, %v2587
        %v2665 = vpack.c.b16 %v2590, %v2589
        %v2666 = vpack.c.b16 %v2592, %v2591
        %v2667 = vpack.c.b16 %v2594, %v2593
        %v2668 = vpack.c.b16 %v2596, %v2595
        %2741 = vmatpush.bf16.msra.mxu0 %v2604
        %2742 = vmatpush.bf16.msra.mxu0 %v2603
        %2743 = vmatpush.bf16.msra.mxu0 %v2602
        %2744 = vmatpush.bf16.msra.mxu0 %v2601
        %2745 = vmatpush.bf16.msra.mxu0 %v2600
        %2746 = vmatpush.bf16.msra.mxu0 %v2599
        %2747 = vmatpush.bf16.msra.mxu0 %v2598
        %2748 = vmatpush.bf16.msra.mxu0 %v2597
        %2749 = vmatmul.bf16.gmra.mxu0 %v572
        %v2750 = vpop.f32.mrf.mxu0
        %v2751 = vadd.f32 %v2307, %v2750
        %v2752 = vpop.f32.mrf.mxu0
        %v2753 = vadd.f32 %v2307, %v2752
        %2754 = vmatmul.bf16.gmra.mxu0 %v1823
        %v2755 = vpop.f32.mrf.mxu0
        %v2756 = vadd.f32 %v2307, %v2755
        %v2757 = vpop.f32.mrf.mxu0
        %v2758 = vadd.f32 %v2307, %v2757
        %2759 = vmatmul.bf16.gmra.mxu0 %v1824
        %v2760 = vpop.f32.mrf.mxu0
        %v2761 = vadd.f32 %v2307, %v2760
        %v2762 = vpop.f32.mrf.mxu0
        %v2763 = vadd.f32 %v2307, %v2762
        %2764 = vmatmul.bf16.gmra.mxu0 %v1825
        %v2765 = vpop.f32.mrf.mxu0
        %v2766 = vadd.f32 %v2307, %v2765
        %v2767 = vpop.f32.mrf.mxu0
        %v2768 = vadd.f32 %v2307, %v2767
        %2769 = vmatmul.bf16.gmra.mxu0 %v1826
        %v2770 = vpop.f32.mrf.mxu0
        %v2771 = vadd.f32 %v2307, %v2770
        %v2772 = vpop.f32.mrf.mxu0
        %v2773 = vadd.f32 %v2307, %v2772
        %2774 = vmatmul.bf16.gmra.mxu0 %v1827
        %v2775 = vpop.f32.mrf.mxu0
        %v2776 = vadd.f32 %v2307, %v2775
        %v2777 = vpop.f32.mrf.mxu0
        %v2778 = vadd.f32 %v2307, %v2777
        %2779 = vmatmul.bf16.gmra.mxu0 %v1828
        %v2780 = vpop.f32.mrf.mxu0
        %v2781 = vadd.f32 %v2307, %v2780
        %v2782 = vpop.f32.mrf.mxu0
        %v2783 = vadd.f32 %v2307, %v2782
        %2784 = vmatmul.bf16.gmra.mxu0 %v1829
        %v2785 = vpop.f32.mrf.mxu0
        %v2786 = vadd.f32 %v2307, %v2785
        %v2787 = vpop.f32.mrf.mxu0
        %v2788 = vadd.f32 %v2307, %v2787
        %2789 = vmatmul.bf16.gmra.mxu0 %v1830
        %v2790 = vpop.f32.mrf.mxu0
        %v2791 = vadd.f32 %v2307, %v2790
        %v2792 = vpop.f32.mrf.mxu0
        %v2793 = vadd.f32 %v2307, %v2792
        %2794 = vmatmul.bf16.gmra.mxu0 %v1831
        %v2795 = vpop.f32.mrf.mxu0
        %v2796 = vadd.f32 %v2307, %v2795
        %v2797 = vpop.f32.mrf.mxu0
        %v2798 = vadd.f32 %v2307, %v2797
        %2799 = vmatmul.bf16.gmra.mxu0 %v1832
        %v2800 = vpop.f32.mrf.mxu0
        %v2801 = vadd.f32 %v2307, %v2800
        %v2802 = vpop.f32.mrf.mxu0
        %v2803 = vadd.f32 %v2307, %v2802
        %2804 = vmatmul.bf16.gmra.mxu0 %v1833
        %v2805 = vpop.f32.mrf.mxu0
        %v2806 = vadd.f32 %v2307, %v2805
        %v2807 = vpop.f32.mrf.mxu0
        %v2808 = vadd.f32 %v2307, %v2807
        %2809 = vmatmul.bf16.gmra.mxu0 %v1834
        %v2810 = vpop.f32.mrf.mxu0
        %v2811 = vadd.f32 %v2307, %v2810
        %v2812 = vpop.f32.mrf.mxu0
        %v2813 = vadd.f32 %v2307, %v2812
        %2814 = vmatmul.bf16.gmra.mxu0 %v1835
        %v2815 = vpop.f32.mrf.mxu0
        %v2816 = vadd.f32 %v2307, %v2815
        %v2817 = vpop.f32.mrf.mxu0
        %v2818 = vadd.f32 %v2307, %v2817
        %2819 = vmatmul.bf16.gmra.mxu0 %v1836
        %v2820 = vpop.f32.mrf.mxu0
        %v2821 = vadd.f32 %v2307, %v2820
        %v2822 = vpop.f32.mrf.mxu0
        %v2823 = vadd.f32 %v2307, %v2822
        %2824 = vmatmul.bf16.gmra.mxu0 %v1837
        %v2825 = vpop.f32.mrf.mxu0
        %v2826 = vadd.f32 %v2307, %v2825
        %v2827 = vpop.f32.mrf.mxu0
        %v2828 = vadd.f32 %v2307, %v2827
        %2829 = vdwg.mxu0
        %2830 = vmatpush.bf16.msra.mxu0 %v2612
        %2831 = vmatpush.bf16.msra.mxu0 %v2611
        %2832 = vmatpush.bf16.msra.mxu0 %v2610
        %2833 = vmatpush.bf16.msra.mxu0 %v2609
        %2834 = vmatpush.bf16.msra.mxu0 %v2608
        %2835 = vmatpush.bf16.msra.mxu0 %v2607
        %2836 = vmatpush.bf16.msra.mxu0 %v2606
        %2837 = vmatpush.bf16.msra.mxu0 %v2605
        %2838 = vmatmul.bf16.gmra.mxu0 %v618
        %v2839 = vpop.f32.mrf.mxu0
        %v2840 = vadd.f32 %v2751, %v2839
        %v2841 = vpop.f32.mrf.mxu0
        %v2842 = vadd.f32 %v2753, %v2841
        %2843 = vmatmul.bf16.gmra.mxu0 %v1866
        %v2844 = vpop.f32.mrf.mxu0
        %v2845 = vadd.f32 %v2756, %v2844
        %v2846 = vpop.f32.mrf.mxu0
        %v2847 = vadd.f32 %v2758, %v2846
        %2848 = vmatmul.bf16.gmra.mxu0 %v1878
        %v2849 = vpop.f32.mrf.mxu0
        %v2850 = vadd.f32 %v2761, %v2849
        %v2851 = vpop.f32.mrf.mxu0
        %v2852 = vadd.f32 %v2763, %v2851
        %2853 = vmatmul.bf16.gmra.mxu0 %v1890
        %v2854 = vpop.f32.mrf.mxu0
        %v2855 = vadd.f32 %v2766, %v2854
        %v2856 = vpop.f32.mrf.mxu0
        %v2857 = vadd.f32 %v2768, %v2856
        %2858 = vmatmul.bf16.gmra.mxu0 %v1902
        %v2859 = vpop.f32.mrf.mxu0
        %v2860 = vadd.f32 %v2771, %v2859
        %v2861 = vpop.f32.mrf.mxu0
        %v2862 = vadd.f32 %v2773, %v2861
        %2863 = vmatmul.bf16.gmra.mxu0 %v1914
        %v2864 = vpop.f32.mrf.mxu0
        %v2865 = vadd.f32 %v2776, %v2864
        %v2866 = vpop.f32.mrf.mxu0
        %v2867 = vadd.f32 %v2778, %v2866
        %2868 = vmatmul.bf16.gmra.mxu0 %v1926
        %v2869 = vpop.f32.mrf.mxu0
        %v2870 = vadd.f32 %v2781, %v2869
        %v2871 = vpop.f32.mrf.mxu0
        %v2872 = vadd.f32 %v2783, %v2871
        %2873 = vmatmul.bf16.gmra.mxu0 %v1938
        %v2874 = vpop.f32.mrf.mxu0
        %v2875 = vadd.f32 %v2786, %v2874
        %v2876 = vpop.f32.mrf.mxu0
        %v2877 = vadd.f32 %v2788, %v2876
        %2878 = vmatmul.bf16.gmra.mxu0 %v1950
        %v2879 = vpop.f32.mrf.mxu0
        %v2880 = vadd.f32 %v2791, %v2879
        %v2881 = vpop.f32.mrf.mxu0
        %v2882 = vadd.f32 %v2793, %v2881
        %2883 = vmatmul.bf16.gmra.mxu0 %v1962
        %v2884 = vpop.f32.mrf.mxu0
        %v2885 = vadd.f32 %v2796, %v2884
        %v2886 = vpop.f32.mrf.mxu0
        %v2887 = vadd.f32 %v2798, %v2886
        %2888 = vmatmul.bf16.gmra.mxu0 %v1974
        %v2889 = vpop.f32.mrf.mxu0
        %v2890 = vadd.f32 %v2801, %v2889
        %v2891 = vpop.f32.mrf.mxu0
        %v2892 = vadd.f32 %v2803, %v2891
        %2893 = vmatmul.bf16.gmra.mxu0 %v1986
        %v2894 = vpop.f32.mrf.mxu0
        %v2895 = vadd.f32 %v2806, %v2894
        %v2896 = vpop.f32.mrf.mxu0
        %v2897 = vadd.f32 %v2808, %v2896
        %2898 = vmatmul.bf16.gmra.mxu0 %v1998
        %v2899 = vpop.f32.mrf.mxu0
        %v2900 = vadd.f32 %v2811, %v2899
        %v2901 = vpop.f32.mrf.mxu0
        %v2902 = vadd.f32 %v2813, %v2901
        %2903 = vmatmul.bf16.gmra.mxu0 %v2010
        %v2904 = vpop.f32.mrf.mxu0
        %v2905 = vadd.f32 %v2816, %v2904
        %v2906 = vpop.f32.mrf.mxu0
        %v2907 = vadd.f32 %v2818, %v2906
        %2908 = vmatmul.bf16.gmra.mxu0 %v2022
        %v2909 = vpop.f32.mrf.mxu0
        %v2910 = vadd.f32 %v2821, %v2909
        %v2911 = vpop.f32.mrf.mxu0
        %v2912 = vadd.f32 %v2823, %v2911
        %2913 = vmatmul.bf16.gmra.mxu0 %v2034
        %v2914 = vpop.f32.mrf.mxu0
        %v2915 = vadd.f32 %v2826, %v2914
        %v2916 = vpop.f32.mrf.mxu0
        %v2917 = vadd.f32 %v2828, %v2916
        %2918 = vdwg.mxu0
        %2919 = vmatpush.bf16.msra.mxu0 %v2620
        %2920 = vmatpush.bf16.msra.mxu0 %v2619
        %2921 = vmatpush.bf16.msra.mxu0 %v2618
        %2922 = vmatpush.bf16.msra.mxu0 %v2617
        %2923 = vmatpush.bf16.msra.mxu0 %v2616
        %2924 = vmatpush.bf16.msra.mxu0 %v2615
        %2925 = vmatpush.bf16.msra.mxu0 %v2614
        %2926 = vmatpush.bf16.msra.mxu0 %v2613
        %2927 = vmatmul.bf16.gmra.mxu0 %v866
        %v2928 = vpop.f32.mrf.mxu0
        %v2929 = vadd.f32 %v2840, %v2928
        %v2930 = vpop.f32.mrf.mxu0
        %v2931 = vadd.f32 %v2842, %v2930
        %2932 = vmatmul.bf16.gmra.mxu0 %v2083
        %v2933 = vpop.f32.mrf.mxu0
        %v2934 = vadd.f32 %v2845, %v2933
        %v2935 = vpop.f32.mrf.mxu0
        %v2936 = vadd.f32 %v2847, %v2935
        %2937 = vmatmul.bf16.gmra.mxu0 %v2086
        %v2938 = vpop.f32.mrf.mxu0
        %v2939 = vadd.f32 %v2850, %v2938
        %v2940 = vpop.f32.mrf.mxu0
        %v2941 = vadd.f32 %v2852, %v2940
        %2942 = vmatmul.bf16.gmra.mxu0 %v2089
        %v2943 = vpop.f32.mrf.mxu0
        %v2944 = vadd.f32 %v2855, %v2943
        %v2945 = vpop.f32.mrf.mxu0
        %v2946 = vadd.f32 %v2857, %v2945
        %2947 = vmatmul.bf16.gmra.mxu0 %v2092
        %v2948 = vpop.f32.mrf.mxu0
        %v2949 = vadd.f32 %v2860, %v2948
        %v2950 = vpop.f32.mrf.mxu0
        %v2951 = vadd.f32 %v2862, %v2950
        %2952 = vmatmul.bf16.gmra.mxu0 %v2095
        %v2953 = vpop.f32.mrf.mxu0
        %v2954 = vadd.f32 %v2865, %v2953
        %v2955 = vpop.f32.mrf.mxu0
        %v2956 = vadd.f32 %v2867, %v2955
        %2957 = vmatmul.bf16.gmra.mxu0 %v2098
        %v2958 = vpop.f32.mrf.mxu0
        %v2959 = vadd.f32 %v2870, %v2958
        %v2960 = vpop.f32.mrf.mxu0
        %v2961 = vadd.f32 %v2872, %v2960
        %2962 = vmatmul.bf16.gmra.mxu0 %v2101
        %v2963 = vpop.f32.mrf.mxu0
        %v2964 = vadd.f32 %v2875, %v2963
        %v2965 = vpop.f32.mrf.mxu0
        %v2966 = vadd.f32 %v2877, %v2965
        %2967 = vmatmul.bf16.gmra.mxu0 %v2104
        %v2968 = vpop.f32.mrf.mxu0
        %v2969 = vadd.f32 %v2880, %v2968
        %v2970 = vpop.f32.mrf.mxu0
        %v2971 = vadd.f32 %v2882, %v2970
        %2972 = vmatmul.bf16.gmra.mxu0 %v2107
        %v2973 = vpop.f32.mrf.mxu0
        %v2974 = vadd.f32 %v2885, %v2973
        %v2975 = vpop.f32.mrf.mxu0
        %v2976 = vadd.f32 %v2887, %v2975
        %2977 = vmatmul.bf16.gmra.mxu0 %v2110
        %v2978 = vpop.f32.mrf.mxu0
        %v2979 = vadd.f32 %v2890, %v2978
        %v2980 = vpop.f32.mrf.mxu0
        %v2981 = vadd.f32 %v2892, %v2980
        %2982 = vmatmul.bf16.gmra.mxu0 %v2113
        %v2983 = vpop.f32.mrf.mxu0
        %v2984 = vadd.f32 %v2895, %v2983
        %v2985 = vpop.f32.mrf.mxu0
        %v2986 = vadd.f32 %v2897, %v2985
        %2987 = vmatmul.bf16.gmra.mxu0 %v2116
        %v2988 = vpop.f32.mrf.mxu0
        %v2989 = vadd.f32 %v2900, %v2988
        %v2990 = vpop.f32.mrf.mxu0
        %v2991 = vadd.f32 %v2902, %v2990
        %2992 = vmatmul.bf16.gmra.mxu0 %v2119
        %v2993 = vpop.f32.mrf.mxu0
        %v2994 = vadd.f32 %v2905, %v2993
        %v2995 = vpop.f32.mrf.mxu0
        %v2996 = vadd.f32 %v2907, %v2995
        %2997 = vmatmul.bf16.gmra.mxu0 %v2122
        %v2998 = vpop.f32.mrf.mxu0
        %v2999 = vadd.f32 %v2910, %v2998
        %v3000 = vpop.f32.mrf.mxu0
        %v3001 = vadd.f32 %v2912, %v3000
        %3002 = vmatmul.bf16.gmra.mxu0 %v2125
        %v3003 = vpop.f32.mrf.mxu0
        %v3004 = vadd.f32 %v2915, %v3003
        %v3005 = vpop.f32.mrf.mxu0
        %v3006 = vadd.f32 %v2917, %v3005
        %3007 = vdwg.mxu0
        %3008 = vmatpush.bf16.msra.mxu0 %v2628
        %3009 = vmatpush.bf16.msra.mxu0 %v2627
        %3010 = vmatpush.bf16.msra.mxu0 %v2626
        %3011 = vmatpush.bf16.msra.mxu0 %v2625
        %3012 = vmatpush.bf16.msra.mxu0 %v2624
        %3013 = vmatpush.bf16.msra.mxu0 %v2623
        %3014 = vmatpush.bf16.msra.mxu0 %v2622
        %3015 = vmatpush.bf16.msra.mxu0 %v2621
        %3016 = vmatmul.bf16.gmra.mxu0 %v1823
        %v3017 = vpop.f32.mrf.mxu0
        %v3018 = vadd.f32 %v2929, %v3017
        %v3019 = vpop.f32.mrf.mxu0
        %v3020 = vadd.f32 %v2931, %v3019
        %3021 = vmatmul.bf16.gmra.mxu0 %v1824
        %v3022 = vpop.f32.mrf.mxu0
        %v3023 = vadd.f32 %v2934, %v3022
        %v3024 = vpop.f32.mrf.mxu0
        %v3025 = vadd.f32 %v2936, %v3024
        %3026 = vmatmul.bf16.gmra.mxu0 %v1825
        %v3027 = vpop.f32.mrf.mxu0
        %v3028 = vadd.f32 %v2939, %v3027
        %v3029 = vpop.f32.mrf.mxu0
        %v3030 = vadd.f32 %v2941, %v3029
        %3031 = vmatmul.bf16.gmra.mxu0 %v1826
        %v3032 = vpop.f32.mrf.mxu0
        %v3033 = vadd.f32 %v2944, %v3032
        %v3034 = vpop.f32.mrf.mxu0
        %v3035 = vadd.f32 %v2946, %v3034
        %3036 = vmatmul.bf16.gmra.mxu0 %v1827
        %v3037 = vpop.f32.mrf.mxu0
        %v3038 = vadd.f32 %v2949, %v3037
        %v3039 = vpop.f32.mrf.mxu0
        %v3040 = vadd.f32 %v2951, %v3039
        %3041 = vmatmul.bf16.gmra.mxu0 %v1828
        %v3042 = vpop.f32.mrf.mxu0
        %v3043 = vadd.f32 %v2954, %v3042
        %v3044 = vpop.f32.mrf.mxu0
        %v3045 = vadd.f32 %v2956, %v3044
        %3046 = vmatmul.bf16.gmra.mxu0 %v1829
        %v3047 = vpop.f32.mrf.mxu0
        %v3048 = vadd.f32 %v2959, %v3047
        %v3049 = vpop.f32.mrf.mxu0
        %v3050 = vadd.f32 %v2961, %v3049
        %3051 = vmatmul.bf16.gmra.mxu0 %v1830
        %v3052 = vpop.f32.mrf.mxu0
        %v3053 = vadd.f32 %v2964, %v3052
        %v3054 = vpop.f32.mrf.mxu0
        %v3055 = vadd.f32 %v2966, %v3054
        %3056 = vmatmul.bf16.gmra.mxu0 %v1831
        %v3057 = vpop.f32.mrf.mxu0
        %v3058 = vadd.f32 %v2969, %v3057
        %v3059 = vpop.f32.mrf.mxu0
        %v3060 = vadd.f32 %v2971, %v3059
        %3061 = vmatmul.bf16.gmra.mxu0 %v1832
        %v3062 = vpop.f32.mrf.mxu0
        %v3063 = vadd.f32 %v2974, %v3062
        %v3064 = vpop.f32.mrf.mxu0
        %v3065 = vadd.f32 %v2976, %v3064
        %3066 = vmatmul.bf16.gmra.mxu0 %v1833
        %v3067 = vpop.f32.mrf.mxu0
        %v3068 = vadd.f32 %v2979, %v3067
        %v3069 = vpop.f32.mrf.mxu0
        %v3070 = vadd.f32 %v2981, %v3069
        %3071 = vmatmul.bf16.gmra.mxu0 %v1834
        %v3072 = vpop.f32.mrf.mxu0
        %v3073 = vadd.f32 %v2984, %v3072
        %v3074 = vpop.f32.mrf.mxu0
        %v3075 = vadd.f32 %v2986, %v3074
        %3076 = vmatmul.bf16.gmra.mxu0 %v1835
        %v3077 = vpop.f32.mrf.mxu0
        %v3078 = vadd.f32 %v2989, %v3077
        %v3079 = vpop.f32.mrf.mxu0
        %v3080 = vadd.f32 %v2991, %v3079
        %3081 = vmatmul.bf16.gmra.mxu0 %v1836
        %v3082 = vpop.f32.mrf.mxu0
        %v3083 = vadd.f32 %v2994, %v3082
        %v3084 = vpop.f32.mrf.mxu0
        %v3085 = vadd.f32 %v2996, %v3084
        %3086 = vmatmul.bf16.gmra.mxu0 %v1837
        %v3087 = vpop.f32.mrf.mxu0
        %v3088 = vadd.f32 %v2999, %v3087
        %v3089 = vpop.f32.mrf.mxu0
        %v3090 = vadd.f32 %v3001, %v3089
        %3091 = vmatmul.bf16.gmra.mxu0 %v1838
        %v3092 = vpop.f32.mrf.mxu0
        %v3093 = vadd.f32 %v3004, %v3092
        %v3094 = vpop.f32.mrf.mxu0
        %v3095 = vadd.f32 %v3006, %v3094
        %3096 = vdwg.mxu0
        %3097 = vmatpush.bf16.msra.mxu0 %v2636
        %3098 = vmatpush.bf16.msra.mxu0 %v2635
        %3099 = vmatpush.bf16.msra.mxu0 %v2634
        %3100 = vmatpush.bf16.msra.mxu0 %v2633
        %3101 = vmatpush.bf16.msra.mxu0 %v2632
        %3102 = vmatpush.bf16.msra.mxu0 %v2631
        %3103 = vmatpush.bf16.msra.mxu0 %v2630
        %3104 = vmatpush.bf16.msra.mxu0 %v2629
        %3105 = vmatmul.bf16.gmra.mxu0 %v1866
        %v3106 = vpop.f32.mrf.mxu0
        %v3107 = vadd.f32 %v3018, %v3106
        %v3108 = vpop.f32.mrf.mxu0
        %v3109 = vadd.f32 %v3020, %v3108
        %3110 = vmatmul.bf16.gmra.mxu0 %v1878
        %v3111 = vpop.f32.mrf.mxu0
        %v3112 = vadd.f32 %v3023, %v3111
        %v3113 = vpop.f32.mrf.mxu0
        %v3114 = vadd.f32 %v3025, %v3113
        %3115 = vmatmul.bf16.gmra.mxu0 %v1890
        %v3116 = vpop.f32.mrf.mxu0
        %v3117 = vadd.f32 %v3028, %v3116
        %v3118 = vpop.f32.mrf.mxu0
        %v3119 = vadd.f32 %v3030, %v3118
        %3120 = vmatmul.bf16.gmra.mxu0 %v1902
        %v3121 = vpop.f32.mrf.mxu0
        %v3122 = vadd.f32 %v3033, %v3121
        %v3123 = vpop.f32.mrf.mxu0
        %v3124 = vadd.f32 %v3035, %v3123
        %3125 = vmatmul.bf16.gmra.mxu0 %v1914
        %v3126 = vpop.f32.mrf.mxu0
        %v3127 = vadd.f32 %v3038, %v3126
        %v3128 = vpop.f32.mrf.mxu0
        %v3129 = vadd.f32 %v3040, %v3128
        %3130 = vmatmul.bf16.gmra.mxu0 %v1926
        %v3131 = vpop.f32.mrf.mxu0
        %v3132 = vadd.f32 %v3043, %v3131
        %v3133 = vpop.f32.mrf.mxu0
        %v3134 = vadd.f32 %v3045, %v3133
        %3135 = vmatmul.bf16.gmra.mxu0 %v1938
        %v3136 = vpop.f32.mrf.mxu0
        %v3137 = vadd.f32 %v3048, %v3136
        %v3138 = vpop.f32.mrf.mxu0
        %v3139 = vadd.f32 %v3050, %v3138
        %3140 = vmatmul.bf16.gmra.mxu0 %v1950
        %v3141 = vpop.f32.mrf.mxu0
        %v3142 = vadd.f32 %v3053, %v3141
        %v3143 = vpop.f32.mrf.mxu0
        %v3144 = vadd.f32 %v3055, %v3143
        %3145 = vmatmul.bf16.gmra.mxu0 %v1962
        %v3146 = vpop.f32.mrf.mxu0
        %v3147 = vadd.f32 %v3058, %v3146
        %v3148 = vpop.f32.mrf.mxu0
        %v3149 = vadd.f32 %v3060, %v3148
        %3150 = vmatmul.bf16.gmra.mxu0 %v1974
        %v3151 = vpop.f32.mrf.mxu0
        %v3152 = vadd.f32 %v3063, %v3151
        %v3153 = vpop.f32.mrf.mxu0
        %v3154 = vadd.f32 %v3065, %v3153
        %3155 = vmatmul.bf16.gmra.mxu0 %v1986
        %v3156 = vpop.f32.mrf.mxu0
        %v3157 = vadd.f32 %v3068, %v3156
        %v3158 = vpop.f32.mrf.mxu0
        %v3159 = vadd.f32 %v3070, %v3158
        %3160 = vmatmul.bf16.gmra.mxu0 %v1998
        %v3161 = vpop.f32.mrf.mxu0
        %v3162 = vadd.f32 %v3073, %v3161
        %v3163 = vpop.f32.mrf.mxu0
        %v3164 = vadd.f32 %v3075, %v3163
        %3165 = vmatmul.bf16.gmra.mxu0 %v2010
        %v3166 = vpop.f32.mrf.mxu0
        %v3167 = vadd.f32 %v3078, %v3166
        %v3168 = vpop.f32.mrf.mxu0
        %v3169 = vadd.f32 %v3080, %v3168
        %3170 = vmatmul.bf16.gmra.mxu0 %v2022
        %v3171 = vpop.f32.mrf.mxu0
        %v3172 = vadd.f32 %v3083, %v3171
        %v3173 = vpop.f32.mrf.mxu0
        %v3174 = vadd.f32 %v3085, %v3173
        %3175 = vmatmul.bf16.gmra.mxu0 %v2034
        %v3176 = vpop.f32.mrf.mxu0
        %v3177 = vadd.f32 %v3088, %v3176
        %v3178 = vpop.f32.mrf.mxu0
        %v3179 = vadd.f32 %v3090, %v3178
        %3180 = vmatmul.bf16.gmra.mxu0 %v2153
        %v3181 = vpop.f32.mrf.mxu0
        %v3182 = vadd.f32 %v3093, %v3181
        %v3183 = vpop.f32.mrf.mxu0
        %v3184 = vadd.f32 %v3095, %v3183
        %3185 = vdwg.mxu0
        %3186 = vmatpush.bf16.msra.mxu0 %v2644
        %3187 = vmatpush.bf16.msra.mxu0 %v2643
        %3188 = vmatpush.bf16.msra.mxu0 %v2642
        %3189 = vmatpush.bf16.msra.mxu0 %v2641
        %3190 = vmatpush.bf16.msra.mxu0 %v2640
        %3191 = vmatpush.bf16.msra.mxu0 %v2639
        %3192 = vmatpush.bf16.msra.mxu0 %v2638
        %3193 = vmatpush.bf16.msra.mxu0 %v2637
        %3194 = vmatmul.bf16.gmra.mxu0 %v2083
        %v3195 = vpop.f32.mrf.mxu0
        %v3196 = vadd.f32 %v3107, %v3195
        %v3197 = vpop.f32.mrf.mxu0
        %v3198 = vadd.f32 %v3109, %v3197
        %3199 = vmatmul.bf16.gmra.mxu0 %v2086
        %v3200 = vpop.f32.mrf.mxu0
        %v3201 = vadd.f32 %v3112, %v3200
        %v3202 = vpop.f32.mrf.mxu0
        %v3203 = vadd.f32 %v3114, %v3202
        %3204 = vmatmul.bf16.gmra.mxu0 %v2089
        %v3205 = vpop.f32.mrf.mxu0
        %v3206 = vadd.f32 %v3117, %v3205
        %v3207 = vpop.f32.mrf.mxu0
        %v3208 = vadd.f32 %v3119, %v3207
        %3209 = vmatmul.bf16.gmra.mxu0 %v2092
        %v3210 = vpop.f32.mrf.mxu0
        %v3211 = vadd.f32 %v3122, %v3210
        %v3212 = vpop.f32.mrf.mxu0
        %v3213 = vadd.f32 %v3124, %v3212
        %3214 = vmatmul.bf16.gmra.mxu0 %v2095
        %v3215 = vpop.f32.mrf.mxu0
        %v3216 = vadd.f32 %v3127, %v3215
        %v3217 = vpop.f32.mrf.mxu0
        %v3218 = vadd.f32 %v3129, %v3217
        %3219 = vmatmul.bf16.gmra.mxu0 %v2098
        %v3220 = vpop.f32.mrf.mxu0
        %v3221 = vadd.f32 %v3132, %v3220
        %v3222 = vpop.f32.mrf.mxu0
        %v3223 = vadd.f32 %v3134, %v3222
        %3224 = vmatmul.bf16.gmra.mxu0 %v2101
        %v3225 = vpop.f32.mrf.mxu0
        %v3226 = vadd.f32 %v3137, %v3225
        %v3227 = vpop.f32.mrf.mxu0
        %v3228 = vadd.f32 %v3139, %v3227
        %3229 = vmatmul.bf16.gmra.mxu0 %v2104
        %v3230 = vpop.f32.mrf.mxu0
        %v3231 = vadd.f32 %v3142, %v3230
        %v3232 = vpop.f32.mrf.mxu0
        %v3233 = vadd.f32 %v3144, %v3232
        %3234 = vmatmul.bf16.gmra.mxu0 %v2107
        %v3235 = vpop.f32.mrf.mxu0
        %v3236 = vadd.f32 %v3147, %v3235
        %v3237 = vpop.f32.mrf.mxu0
        %v3238 = vadd.f32 %v3149, %v3237
        %3239 = vmatmul.bf16.gmra.mxu0 %v2110
        %v3240 = vpop.f32.mrf.mxu0
        %v3241 = vadd.f32 %v3152, %v3240
        %v3242 = vpop.f32.mrf.mxu0
        %v3243 = vadd.f32 %v3154, %v3242
        %3244 = vmatmul.bf16.gmra.mxu0 %v2113
        %v3245 = vpop.f32.mrf.mxu0
        %v3246 = vadd.f32 %v3157, %v3245
        %v3247 = vpop.f32.mrf.mxu0
        %v3248 = vadd.f32 %v3159, %v3247
        %3249 = vmatmul.bf16.gmra.mxu0 %v2116
        %v3250 = vpop.f32.mrf.mxu0
        %v3251 = vadd.f32 %v3162, %v3250
        %v3252 = vpop.f32.mrf.mxu0
        %v3253 = vadd.f32 %v3164, %v3252
        %3254 = vmatmul.bf16.gmra.mxu0 %v2119
        %v3255 = vpop.f32.mrf.mxu0
        %v3256 = vadd.f32 %v3167, %v3255
        %v3257 = vpop.f32.mrf.mxu0
        %v3258 = vadd.f32 %v3169, %v3257
        %3259 = vmatmul.bf16.gmra.mxu0 %v2122
        %v3260 = vpop.f32.mrf.mxu0
        %v3261 = vadd.f32 %v3172, %v3260
        %v3262 = vpop.f32.mrf.mxu0
        %v3263 = vadd.f32 %v3174, %v3262
        %3264 = vmatmul.bf16.gmra.mxu0 %v2125
        %v3265 = vpop.f32.mrf.mxu0
        %v3266 = vadd.f32 %v3177, %v3265
        %v3267 = vpop.f32.mrf.mxu0
        %v3268 = vadd.f32 %v3179, %v3267
        %3269 = vmatmul.bf16.gmra.mxu0 %v2159
        %v3270 = vpop.f32.mrf.mxu0
        %v3271 = vadd.f32 %v3182, %v3270
        %v3272 = vpop.f32.mrf.mxu0
        %v3273 = vadd.f32 %v3184, %v3272
        %3274 = vdwg.mxu0
        %3275 = vmatpush.bf16.msra.mxu0 %v2652
        %3276 = vmatpush.bf16.msra.mxu0 %v2651
        %3277 = vmatpush.bf16.msra.mxu0 %v2650
        %3278 = vmatpush.bf16.msra.mxu0 %v2649
        %3279 = vmatpush.bf16.msra.mxu0 %v2648
        %3280 = vmatpush.bf16.msra.mxu0 %v2647
        %3281 = vmatpush.bf16.msra.mxu0 %v2646
        %3282 = vmatpush.bf16.msra.mxu0 %v2645
        %3283 = vmatmul.bf16.gmra.mxu0 %v1824
        %v3284 = vpop.f32.mrf.mxu0
        %v3285 = vadd.f32 %v3196, %v3284
        %v3286 = vpop.f32.mrf.mxu0
        %v3287 = vadd.f32 %v3198, %v3286
        %3288 = vmatmul.bf16.gmra.mxu0 %v1825
        %v3289 = vpop.f32.mrf.mxu0
        %v3290 = vadd.f32 %v3201, %v3289
        %v3291 = vpop.f32.mrf.mxu0
        %v3292 = vadd.f32 %v3203, %v3291
        %3293 = vmatmul.bf16.gmra.mxu0 %v1826
        %v3294 = vpop.f32.mrf.mxu0
        %v3295 = vadd.f32 %v3206, %v3294
        %v3296 = vpop.f32.mrf.mxu0
        %v3297 = vadd.f32 %v3208, %v3296
        %3298 = vmatmul.bf16.gmra.mxu0 %v1827
        %v3299 = vpop.f32.mrf.mxu0
        %v3300 = vadd.f32 %v3211, %v3299
        %v3301 = vpop.f32.mrf.mxu0
        %v3302 = vadd.f32 %v3213, %v3301
        %3303 = vmatmul.bf16.gmra.mxu0 %v1828
        %v3304 = vpop.f32.mrf.mxu0
        %v3305 = vadd.f32 %v3216, %v3304
        %v3306 = vpop.f32.mrf.mxu0
        %v3307 = vadd.f32 %v3218, %v3306
        %3308 = vmatmul.bf16.gmra.mxu0 %v1829
        %v3309 = vpop.f32.mrf.mxu0
        %v3310 = vadd.f32 %v3221, %v3309
        %v3311 = vpop.f32.mrf.mxu0
        %v3312 = vadd.f32 %v3223, %v3311
        %3313 = vmatmul.bf16.gmra.mxu0 %v1830
        %v3314 = vpop.f32.mrf.mxu0
        %v3315 = vadd.f32 %v3226, %v3314
        %v3316 = vpop.f32.mrf.mxu0
        %v3317 = vadd.f32 %v3228, %v3316
        %3318 = vmatmul.bf16.gmra.mxu0 %v1831
        %v3319 = vpop.f32.mrf.mxu0
        %v3320 = vadd.f32 %v3231, %v3319
        %v3321 = vpop.f32.mrf.mxu0
        %v3322 = vadd.f32 %v3233, %v3321
        %3323 = vmatmul.bf16.gmra.mxu0 %v1832
        %v3324 = vpop.f32.mrf.mxu0
        %v3325 = vadd.f32 %v3236, %v3324
        %v3326 = vpop.f32.mrf.mxu0
        %v3327 = vadd.f32 %v3238, %v3326
        %3328 = vmatmul.bf16.gmra.mxu0 %v1833
        %v3329 = vpop.f32.mrf.mxu0
        %v3330 = vadd.f32 %v3241, %v3329
        %v3331 = vpop.f32.mrf.mxu0
        %v3332 = vadd.f32 %v3243, %v3331
        %3333 = vmatmul.bf16.gmra.mxu0 %v1834
        %v3334 = vpop.f32.mrf.mxu0
        %v3335 = vadd.f32 %v3246, %v3334
        %v3336 = vpop.f32.mrf.mxu0
        %v3337 = vadd.f32 %v3248, %v3336
        %3338 = vmatmul.bf16.gmra.mxu0 %v1835
        %v3339 = vpop.f32.mrf.mxu0
        %v3340 = vadd.f32 %v3251, %v3339
        %v3341 = vpop.f32.mrf.mxu0
        %v3342 = vadd.f32 %v3253, %v3341
        %3343 = vmatmul.bf16.gmra.mxu0 %v1836
        %v3344 = vpop.f32.mrf.mxu0
        %v3345 = vadd.f32 %v3256, %v3344
        %v3346 = vpop.f32.mrf.mxu0
        %v3347 = vadd.f32 %v3258, %v3346
        %3348 = vmatmul.bf16.gmra.mxu0 %v1837
        %v3349 = vpop.f32.mrf.mxu0
        %v3350 = vadd.f32 %v3261, %v3349
        %v3351 = vpop.f32.mrf.mxu0
        %v3352 = vadd.f32 %v3263, %v3351
        %3353 = vmatmul.bf16.gmra.mxu0 %v1838
        %v3354 = vpop.f32.mrf.mxu0
        %v3355 = vadd.f32 %v3266, %v3354
        %v3356 = vpop.f32.mrf.mxu0
        %v3357 = vadd.f32 %v3268, %v3356
        %3358 = vmatmul.bf16.gmra.mxu0 %v572
        %v3359 = vpop.f32.mrf.mxu0
        %v3360 = vadd.f32 %v3271, %v3359
        %v3361 = vpop.f32.mrf.mxu0
        %v3362 = vadd.f32 %v3273, %v3361
        %3363 = vdwg.mxu0
        %3364 = vmatpush.bf16.msra.mxu0 %v2660
        %3365 = vmatpush.bf16.msra.mxu0 %v2659
        %3366 = vmatpush.bf16.msra.mxu0 %v2658
        %3367 = vmatpush.bf16.msra.mxu0 %v2657
        %3368 = vmatpush.bf16.msra.mxu0 %v2656
        %3369 = vmatpush.bf16.msra.mxu0 %v2655
        %3370 = vmatpush.bf16.msra.mxu0 %v2654
        %3371 = vmatpush.bf16.msra.mxu0 %v2653
        %3372 = vmatmul.bf16.gmra.mxu0 %v1878
        %v3373 = vpop.f32.mrf.mxu0
        %v3374 = vadd.f32 %v3285, %v3373
        %v3375 = vpop.f32.mrf.mxu0
        %v3376 = vadd.f32 %v3287, %v3375
        %3377 = vmatmul.bf16.gmra.mxu0 %v1890
        %v3378 = vpop.f32.mrf.mxu0
        %v3379 = vadd.f32 %v3290, %v3378
        %v3380 = vpop.f32.mrf.mxu0
        %v3381 = vadd.f32 %v3292, %v3380
        %3382 = vmatmul.bf16.gmra.mxu0 %v1902
        %v3383 = vpop.f32.mrf.mxu0
        %v3384 = vadd.f32 %v3295, %v3383
        %v3385 = vpop.f32.mrf.mxu0
        %v3386 = vadd.f32 %v3297, %v3385
        %3387 = vmatmul.bf16.gmra.mxu0 %v1914
        %v3388 = vpop.f32.mrf.mxu0
        %v3389 = vadd.f32 %v3300, %v3388
        %v3390 = vpop.f32.mrf.mxu0
        %v3391 = vadd.f32 %v3302, %v3390
        %3392 = vmatmul.bf16.gmra.mxu0 %v1926
        %v3393 = vpop.f32.mrf.mxu0
        %v3394 = vadd.f32 %v3305, %v3393
        %v3395 = vpop.f32.mrf.mxu0
        %v3396 = vadd.f32 %v3307, %v3395
        %3397 = vmatmul.bf16.gmra.mxu0 %v1938
        %v3398 = vpop.f32.mrf.mxu0
        %v3399 = vadd.f32 %v3310, %v3398
        %v3400 = vpop.f32.mrf.mxu0
        %v3401 = vadd.f32 %v3312, %v3400
        %3402 = vmatmul.bf16.gmra.mxu0 %v1950
        %v3403 = vpop.f32.mrf.mxu0
        %v3404 = vadd.f32 %v3315, %v3403
        %v3405 = vpop.f32.mrf.mxu0
        %v3406 = vadd.f32 %v3317, %v3405
        %3407 = vmatmul.bf16.gmra.mxu0 %v1962
        %v3408 = vpop.f32.mrf.mxu0
        %v3409 = vadd.f32 %v3320, %v3408
        %v3410 = vpop.f32.mrf.mxu0
        %v3411 = vadd.f32 %v3322, %v3410
        %3412 = vmatmul.bf16.gmra.mxu0 %v1974
        %v3413 = vpop.f32.mrf.mxu0
        %v3414 = vadd.f32 %v3325, %v3413
        %v3415 = vpop.f32.mrf.mxu0
        %v3416 = vadd.f32 %v3327, %v3415
        %3417 = vmatmul.bf16.gmra.mxu0 %v1986
        %v3418 = vpop.f32.mrf.mxu0
        %v3419 = vadd.f32 %v3330, %v3418
        %v3420 = vpop.f32.mrf.mxu0
        %v3421 = vadd.f32 %v3332, %v3420
        %3422 = vmatmul.bf16.gmra.mxu0 %v1998
        %v3423 = vpop.f32.mrf.mxu0
        %v3424 = vadd.f32 %v3335, %v3423
        %v3425 = vpop.f32.mrf.mxu0
        %v3426 = vadd.f32 %v3337, %v3425
        %3427 = vmatmul.bf16.gmra.mxu0 %v2010
        %v3428 = vpop.f32.mrf.mxu0
        %v3429 = vadd.f32 %v3340, %v3428
        %v3430 = vpop.f32.mrf.mxu0
        %v3431 = vadd.f32 %v3342, %v3430
        %3432 = vmatmul.bf16.gmra.mxu0 %v2022
        %v3433 = vpop.f32.mrf.mxu0
        %v3434 = vadd.f32 %v3345, %v3433
        %v3435 = vpop.f32.mrf.mxu0
        %v3436 = vadd.f32 %v3347, %v3435
        %3437 = vmatmul.bf16.gmra.mxu0 %v2034
        %v3438 = vpop.f32.mrf.mxu0
        %v3439 = vadd.f32 %v3350, %v3438
        %v3440 = vpop.f32.mrf.mxu0
        %v3441 = vadd.f32 %v3352, %v3440
        %3442 = vmatmul.bf16.gmra.mxu0 %v2153
        %v3443 = vpop.f32.mrf.mxu0
        %v3444 = vadd.f32 %v3355, %v3443
        %v3445 = vpop.f32.mrf.mxu0
        %v3446 = vadd.f32 %v3357, %v3445
        %3447 = vmatmul.bf16.gmra.mxu0 %v618
        %v3448 = vpop.f32.mrf.mxu0
        %v3449 = vadd.f32 %v3360, %v3448
        %v3450 = vpop.f32.mrf.mxu0
        %v3451 = vadd.f32 %v3362, %v3450
        %3452 = vdwg.mxu0
        %3453 = vmatpush.bf16.msra.mxu0 %v2668
        %3454 = vmatpush.bf16.msra.mxu0 %v2667
        %3455 = vmatpush.bf16.msra.mxu0 %v2666
        %3456 = vmatpush.bf16.msra.mxu0 %v2665
        %3457 = vmatpush.bf16.msra.mxu0 %v2664
        %3458 = vmatpush.bf16.msra.mxu0 %v2663
        %3459 = vmatpush.bf16.msra.mxu0 %v2662
        %3460 = vmatpush.bf16.msra.mxu0 %v2661
        %3461 = vmatmul.bf16.gmra.mxu0 %v2086
        %v3462 = vpop.f32.mrf.mxu0
        %v3463 = vadd.f32 %v3374, %v3462
        %v3464 = vpop.f32.mrf.mxu0
        %v3465 = vadd.f32 %v3376, %v3464
        %3466 = vmatmul.bf16.gmra.mxu0 %v2089
        %v3467 = vpop.f32.mrf.mxu0
        %v3468 = vadd.f32 %v3379, %v3467
        %v3469 = vpop.f32.mrf.mxu0
        %v3470 = vadd.f32 %v3381, %v3469
        %3471 = vmatmul.bf16.gmra.mxu0 %v2092
        %v3472 = vpop.f32.mrf.mxu0
        %v3473 = vadd.f32 %v3384, %v3472
        %v3474 = vpop.f32.mrf.mxu0
        %v3475 = vadd.f32 %v3386, %v3474
        %3476 = vmatmul.bf16.gmra.mxu0 %v2095
        %v3477 = vpop.f32.mrf.mxu0
        %v3478 = vadd.f32 %v3389, %v3477
        %v3479 = vpop.f32.mrf.mxu0
        %v3480 = vadd.f32 %v3391, %v3479
        %3481 = vmatmul.bf16.gmra.mxu0 %v2098
        %v3482 = vpop.f32.mrf.mxu0
        %v3483 = vadd.f32 %v3394, %v3482
        %v3484 = vpop.f32.mrf.mxu0
        %v3485 = vadd.f32 %v3396, %v3484
        %3486 = vmatmul.bf16.gmra.mxu0 %v2101
        %v3487 = vpop.f32.mrf.mxu0
        %v3488 = vadd.f32 %v3399, %v3487
        %v3489 = vpop.f32.mrf.mxu0
        %v3490 = vadd.f32 %v3401, %v3489
        %3491 = vmatmul.bf16.gmra.mxu0 %v2104
        %v3492 = vpop.f32.mrf.mxu0
        %v3493 = vadd.f32 %v3404, %v3492
        %v3494 = vpop.f32.mrf.mxu0
        %v3495 = vadd.f32 %v3406, %v3494
        %3496 = vmatmul.bf16.gmra.mxu0 %v2107
        %v3497 = vpop.f32.mrf.mxu0
        %v3498 = vadd.f32 %v3409, %v3497
        %v3499 = vpop.f32.mrf.mxu0
        %v3500 = vadd.f32 %v3411, %v3499
        %3501 = vmatmul.bf16.gmra.mxu0 %v2110
        %v3502 = vpop.f32.mrf.mxu0
        %v3503 = vadd.f32 %v3414, %v3502
        %v3504 = vpop.f32.mrf.mxu0
        %v3505 = vadd.f32 %v3416, %v3504
        %3506 = vmatmul.bf16.gmra.mxu0 %v2113
        %v3507 = vpop.f32.mrf.mxu0
        %v3508 = vadd.f32 %v3419, %v3507
        %v3509 = vpop.f32.mrf.mxu0
        %v3510 = vadd.f32 %v3421, %v3509
        %3511 = vmatmul.bf16.gmra.mxu0 %v2116
        %v3512 = vpop.f32.mrf.mxu0
        %v3513 = vadd.f32 %v3424, %v3512
        %v3514 = vpop.f32.mrf.mxu0
        %v3515 = vadd.f32 %v3426, %v3514
        %3516 = vmatmul.bf16.gmra.mxu0 %v2119
        %v3517 = vpop.f32.mrf.mxu0
        %v3518 = vadd.f32 %v3429, %v3517
        %v3519 = vpop.f32.mrf.mxu0
        %v3520 = vadd.f32 %v3431, %v3519
        %3521 = vmatmul.bf16.gmra.mxu0 %v2122
        %v3522 = vpop.f32.mrf.mxu0
        %v3523 = vadd.f32 %v3434, %v3522
        %v3524 = vpop.f32.mrf.mxu0
        %v3525 = vadd.f32 %v3436, %v3524
        %3526 = vmatmul.bf16.gmra.mxu0 %v2125
        %v3527 = vpop.f32.mrf.mxu0
        %v3528 = vadd.f32 %v3439, %v3527
        %v3529 = vpop.f32.mrf.mxu0
        %v3530 = vadd.f32 %v3441, %v3529
        %3531 = vmatmul.bf16.gmra.mxu0 %v2159
        %v3532 = vpop.f32.mrf.mxu0
        %v3533 = vadd.f32 %v3444, %v3532
        %v3534 = vpop.f32.mrf.mxu0
        %v3535 = vadd.f32 %v3446, %v3534
        %3536 = vmatmul.bf16.gmra.mxu0 %v866
        %v3537 = vpop.f32.mrf.mxu0
        %v3538 = vadd.f32 %v3449, %v3537
        %v3539 = vpop.f32.mrf.mxu0
        %v3540 = vadd.f32 %v3451, %v3539
        %3541 = vdwg.mxu0
        %vm3542 = vcmask 523264
        %3543 = vst.msk [vmem:[%s270] sm:$0xff] %vm3542, %v3463
        %3544 = vst.msk [vmem:[%s270 + $0x8] sm:$0xff] %vm3542, %v3465
        %3545 = vst.msk [vmem:[%s270 + $0x10] sm:$0xff] %vm3542, %v3468
        %3546 = vst.msk [vmem:[%s270 + $0x18] sm:$0xff] %vm3542, %v3470
        %3547 = vst.msk [vmem:[%s270 + $0x20] sm:$0xff] %vm3542, %v3473
        %3548 = vst.msk [vmem:[%s270 + $0x28] sm:$0xff] %vm3542, %v3475
        %3549 = vst.msk [vmem:[%s270 + $0x30] sm:$0xff] %vm3542, %v3478
        %3550 = vst.msk [vmem:[%s270 + $0x38] sm:$0xff] %vm3542, %v3480
        %3551 = vst.msk [vmem:[%s270 + $0x40] sm:$0xff] %vm3542, %v3483
        %3552 = vst.msk [vmem:[%s270 + $0x48] sm:$0xff] %vm3542, %v3485
        %3553 = vst.msk [vmem:[%s270 + $0x50] sm:$0xff] %vm3542, %v3488
        %3554 = vst.msk [vmem:[%s270 + $0x58] sm:$0xff] %vm3542, %v3490
        %3555 = vst.msk [vmem:[%s270 + $0x60] sm:$0xff] %vm3542, %v3493
        %3556 = vst.msk [vmem:[%s270 + $0x68] sm:$0xff] %vm3542, %v3495
        %3557 = vst.msk [vmem:[%s270 + $0x70] sm:$0xff] %vm3542, %v3498
        %3558 = vst.msk [vmem:[%s270 + $0x78] sm:$0xff] %vm3542, %v3500
        %3559 = vst.msk [vmem:[%s270 + $0x80] sm:$0xff] %vm3542, %v3503
        %3560 = vst.msk [vmem:[%s270 + $0x88] sm:$0xff] %vm3542, %v3505
        %3561 = vst.msk [vmem:[%s270 + $0x90] sm:$0xff] %vm3542, %v3508
        %3562 = vst.msk [vmem:[%s270 + $0x98] sm:$0xff] %vm3542, %v3510
        %3563 = vst.msk [vmem:[%s270 + $0xa0] sm:$0xff] %vm3542, %v3513
        %3564 = vst.msk [vmem:[%s270 + $0xa8] sm:$0xff] %vm3542, %v3515
        %3565 = vst.msk [vmem:[%s270 + $0xb0] sm:$0xff] %vm3542, %v3518
        %3566 = vst.msk [vmem:[%s270 + $0xb8] sm:$0xff] %vm3542, %v3520
        %3567 = vst.msk [vmem:[%s270 + $0xc0] sm:$0xff] %vm3542, %v3523
        %3568 = vst.msk [vmem:[%s270 + $0xc8] sm:$0xff] %vm3542, %v3525
        %3569 = vst.msk [vmem:[%s270 + $0xd0] sm:$0xff] %vm3542, %v3528
        %3570 = vst.msk [vmem:[%s270 + $0xd8] sm:$0xff] %vm3542, %v3530
        %3571 = vst.msk [vmem:[%s270 + $0xe0] sm:$0xff] %vm3542, %v3533
        %3572 = vst.msk [vmem:[%s270 + $0xe8] sm:$0xff] %vm3542, %v3535
        %3573 = vst.msk [vmem:[%s270 + $0xf0] sm:$0xff] %vm3542, %v3538
        %3574 = vst.msk [vmem:[%s270 + $0xf8] sm:$0xff] %vm3542, %v3540
        %p3575 = scmp.lt.s32.totalorder %s18, 1
        %s3576 = scalar_select %p3575, %s18, 1
        %s3577 = smul.addr %s3576, 32
        %s3578 = smul.addr %s3577, 8
        %s3579 = scalar_lea.vmem %s5, %s3578
        // Predicated region
        $region53: #{naive_trans_conv_forward.1} parent=39 // pred_check
          %p3580 = pneg %p146
        $region54: #{naive_trans_conv_forward.1} parent=39 // pred_check_branch
          %3582 = sbr.rel (%p3580) target = $region56
        $region55: #{naive_trans_conv_forward.1} parent=39 // pred_region
          _
        $region56: #{naive_trans_conv_forward.1} parent=39 // pred_fallthru
          _
      $region40: #{naive_trans_conv_forward.1} parent=5 // pred_fallthru
        _
      %p3583 = scmp.le.s32.totalorder 2, %s13
      // Predicated region
      $region57: #{naive_trans_conv_forward.1} parent=5 // pred_check
        %p3584 = pneg %p3583
      $region58: #{naive_trans_conv_forward.1} parent=5 // pred_check_branch
        %3586 = sbr.rel (%p3584) target = $region60
      $region59: #{naive_trans_conv_forward.1} parent=5 // pred_region
        %s3587 = ssub.s32 %s13, 2
        // Predicated region
        $region61: #{naive_trans_conv_forward.1} parent=59 // pred_check
          %p3588 = pneg %p152
        $region62: #{naive_trans_conv_forward.1} parent=59 // pred_check_branch
          %3590 = sbr.rel (%p3588) target = $region64
        $region63: #{naive_trans_conv_forward.1} parent=59 // pred_region
          %p3591 = scmp.lt.s32.totalorder %s19, 1
          %s3592 = scalar_select %p3591, %s19, 1
          %s3593 = smul.addr %s3592, 32
          %s3594 = smul.addr %s3593, 8
          %s3595 = scalar_lea.vmem %s5, %s3594
        $region64: #{naive_trans_conv_forward.1} parent=59 // pred_fallthru
          _
      $region60: #{naive_trans_conv_forward.1} parent=5 // pred_fallthru
        _
    $region6: #{naive_trans_conv_forward.1} parent=1 // loop_footer
      %s17 = sadd.s32 1, %s13
    $region7: #{naive_trans_conv_forward.1} parent=1 // loop_footer_branch
      %12 = sbr.rel target = $region3
    $region8: #{naive_trans_conv_forward.1} parent=1 // loop_exit
      _
    %3596 = vsyncpa [#allocation3], 1
    %s3597 = scalar_lea.sflag [#allocation3], 1
    %3598 = vsyncpa %s3597, 1
    %3599 = vsyncpa [#allocation5], 1

</llo_original>
